<compile_context>
chip_gen: v7x
topology: tpu7x:2x2x1
jax: 0.10.0
libtpu: 0.0.40
codegen_flags: <defaults>
</compile_context>

<pallas_src>
import jax
import jax.numpy as jnp
from jax.experimental import pallas as pl
from jax.experimental.pallas import tpu as pltpu

EMBED_DIM = 768
IN_CHANNELS = 3
PATCH_SIZE = 16
PATCH_DIM = IN_CHANNELS * PATCH_SIZE * PATCH_SIZE  # 768


def _round_up(x, m):
    return ((x + m - 1) // m) * m


def _unfold_patches(x):
    """nn.Unfold(k=P, s=P) + permute(0,2,1): (B,C,H,W) -> (B, L, C*P*P).

    Pure layout. Feature order is (c, kh, kw) and patches enumerate row-major
    over the spatial grid, exactly matching PyTorch.
    """
    B, C, H, W = x.shape
    P = PATCH_SIZE
    hp, wp = H // P, W // P
    x = x.reshape(B, C, hp, P, wp, P)
    x = x.transpose(0, 2, 4, 1, 3, 5)          # (B, hp, wp, C, P, P)
    return x.reshape(B, hp * wp, C * P * P)


def prepare_params(weight, bias):
    """Hoisted once (module init): PyTorch (E, K) weight -> (K, E) bf16; bias -> (1, E) f32."""
    w_t = jnp.asarray(weight).T.astype(jnp.bfloat16)        # y = p @ W^T + b
    b2 = jnp.asarray(bias).reshape(1, EMBED_DIM).astype(jnp.float32)
    return w_t, b2


def _patch_embed_kernel(p_ref, w_ref, b_ref, o_ref):
    # p_ref: (TILE_M, K) bf16 patch rows (pipelined); w_ref: (K, E) bf16
    # (VMEM-resident); b_ref: (1, E) f32 (resident). f32 accumulation on MXU.
    acc = jnp.dot(p_ref[...], w_ref[...], preferred_element_type=jnp.float32)
    o_ref[...] = (acc + b_ref[...]).astype(o_ref.dtype)


def patcher_unfold(x, w_t, b2, *, tile_m=512, out_dtype=jnp.float32):
    """x: (B,C,H,W); w_t: (PATCH_DIM, EMBED_DIM) bf16; b2: (1, EMBED_DIM) f32."""
    B, C, H, W = x.shape
    assert C == IN_CHANNELS and H % PATCH_SIZE == 0 and W % PATCH_SIZE == 0
    L = (H // PATCH_SIZE) * (W // PATCH_SIZE)
    K, E = PATCH_DIM, EMBED_DIM
    M = B * L

    # bf16 BEFORE the unfold/transpose: layout pass moves 2-byte elements and
    # XLA fuses convert+transpose into a single pass (wrapper is jitted).
    patches = _unfold_patches(x.astype(jnp.bfloat16)).reshape(M, K)

    # Row tile: big (amortize ~0.35 us per grid step), clamped to M rounded to
    # the 8-sublane granule, and balanced so the grid has >= 2 steps whenever
    # M allows it (keeps both v7x TensorCores busy via "parallel" semantics).
    tm = min(tile_m, max(8, _round_up(M, 8)))
    tm = min(tm, max(8, _round_up(pl.cdiv(M, 2), 8)))
    grid = (pl.cdiv(M, tm),)  # ragged last block: padded reads, masked store

    out_bytes = jnp.dtype(out_dtype).itemsize
    # Real VMEM footprint: double-buffered x (bf16) + out tiles, resident bf16
    # weight, tiny bias — plus headroom. Never clamps below the footprint.
    vmem_bytes = 2 * (tm * K * 2 + tm * E * out_bytes) + K * E * 2 + E * 4
    vmem_limit = vmem_bytes + (8 << 20)

    cost = pl.CostEstimate(
        flops=2 * M * K * E,
        transcendentals=0,
        bytes_accessed=M * K * 2 + K * E * 2 + E * 4 + M * E * out_bytes,
    )

    out = pl.pallas_call(
        _patch_embed_kernel,
        out_shape=jax.ShapeDtypeStruct((M, E), out_dtype),
        grid_spec=pltpu.PrefetchScalarGridSpec(
            num_scalar_prefetch=0,
            grid=grid,
            in_specs=[
                pl.BlockSpec((tm, K), lambda i: (i, 0)),   # patch rows (pipelined)
                pl.BlockSpec((K, E), lambda i: (0, 0)),    # weight, VMEM-resident
                pl.BlockSpec((1, E), lambda i: (0, 0)),    # bias, VMEM-resident
            ],
            out_specs=pl.BlockSpec((tm, E), lambda i: (i, 0)),  # 768 = 6*128 lanes
        ),
        compiler_params=pltpu.CompilerParams(
            dimension_semantics=("parallel",),
            vmem_limit_bytes=vmem_limit,
        ),
        cost_estimate=cost,
    )(patches, w_t, b2)

    return out.reshape(B, L, E)


def reference(x, weight, bias):
    """Pure-JAX f32 reference matching the PyTorch module exactly."""
    patches = _unfold_patches(x.astype(jnp.float32))          # (B, L, 768)
    return patches @ weight.T.astype(jnp.float32) + bias.astype(jnp.float32)


if __name__ == "__main__":
    key = jax.random.PRNGKey(0)
    k_x, k_w, k_b = jax.random.split(key, 3)

    # Small shapes consistent with the module: 2 images of 3x32x32 -> 4 patches each.
    B, H, W = 2, 32, 32
    x = jax.random.normal(k_x, (B, IN_CHANNELS, H, W), dtype=jnp.float32)

    # PyTorch-style Linear init: uniform(-1/sqrt(in_features), 1/sqrt(in_features)).
    bound = 1.0 / jnp.sqrt(jnp.float32(PATCH_DIM))
    weight = jax.random.uniform(k_w, (EMBED_DIM, PATCH_DIM), jnp.float32, -bound, bound)
    bias = jax.random.uniform(k_b, (EMBED_DIM,), jnp.float32, -bound, bound)

    # Hoisted once ("module init"), not per forward call.
    w_t, b2 = prepare_params(weight, bias)

    fwd = jax.jit(patcher_unfold)   # fuses the bf16 cast + unfold transpose
    out = jax.block_until_ready(fwd(x, w_t, b2))

    L = (H // PATCH_SIZE) * (W // PATCH_SIZE)
    assert out.shape == (B, L, EMBED_DIM)
    assert out.dtype == jnp.float32

    ref = reference(x, weight, bias)
    # bf16 matmul operands (f32 accumulation) -> loosened tolerance; typical
    # |error| is a few 1e-3 at these magnitudes.
    assert jnp.allclose(out, ref, atol=2e-2, rtol=2e-2), "mismatch vs reference"

    print("KERNEL_OK")
</pallas_src>

<mosaic_0001>
module attributes {stable_mosaic.version = 11 : i64} {
  func.func @_patch_embed_kernel(%arg0: i32, %arg1: memref<8x768xbf16, #tpu.memory_space<vmem>>, %arg2: memref<768x768xbf16, #tpu.memory_space<vmem>>, %arg3: memref<1x768xf32, #tpu.memory_space<vmem>>, %arg4: memref<8x768xf32, #tpu.memory_space<vmem>>) attributes {dimension_semantics = [#tpu.dimension_semantics<parallel>], iteration_bounds = array<i64: 1>, scalar_prefetch = 0 : i64, scratch_operands = 0 : i64, tpu.core_type = #tpu.core_type<tc>, window_params = [{transform_indices = @transform_0, window_bounds = array<i64: 8, 768>}, {pipeline_mode = #tpu.pipeline_mode<synchronous>, transform_indices = @transform_1, window_bounds = array<i64: 768, 768>}, {pipeline_mode = #tpu.pipeline_mode<synchronous>, transform_indices = @transform_2, window_bounds = array<i64: 1, 768>}, {transform_indices = @transform_3, window_bounds = array<i64: 8, 768>}]} {
    %c0 = arith.constant 0 : index
    %c0_0 = arith.constant 0 : index
    %0 = vector.load %arg1[%c0, %c0_0] : memref<8x768xbf16, #tpu.memory_space<vmem>>, vector<8x768xbf16>
    %c0_1 = arith.constant 0 : index
    %c0_2 = arith.constant 0 : index
    %1 = vector.load %arg2[%c0_1, %c0_2] : memref<768x768xbf16, #tpu.memory_space<vmem>>, vector<768x768xbf16>
    %cst = arith.constant dense<0.000000e+00> : vector<8x768xf32>
    %2 = tpu.matmul %0, %1, %cst {dimension_numbers = #tpu.dot_dimension_numbers<[1], [0], [0], [1], [0, 0, 1, 1], [], []>} : vector<8x768xbf16>, vector<768x768xbf16>, vector<8x768xf32> -> vector<8x768xf32>
    %c0_3 = arith.constant 0 : index
    %c0_4 = arith.constant 0 : index
    %3 = vector.load %arg3[%c0_3, %c0_4] : memref<1x768xf32, #tpu.memory_space<vmem>>, vector<1x768xf32>
    %4 = vector.broadcast %3 : vector<1x768xf32> to vector<8x768xf32>
    %5 = arith.addf %2, %4 : vector<8x768xf32>
    %c0_5 = arith.constant 0 : index
    %c0_6 = arith.constant 0 : index
    %6 = vector.load %arg4[%c0_5, %c0_6] : memref<8x768xf32, #tpu.memory_space<vmem>>, vector<8x768xf32>
    tpu.vector_store %arg4[%c0_5, %c0_6], %5 {strides = array<i32>} : memref<8x768xf32, #tpu.memory_space<vmem>>, vector<8x768xf32>,
    return
  }
  func.func @transform_0(%arg0: i32) -> (i32, i32) {
    %c0_i32 = arith.constant 0 : i32
    %c0_i32_0 = arith.constant 0 : i32
    return %arg0, %c0_i32 : i32, i32
  }
  func.func @transform_1(%arg0: i32) -> (i32, i32) {
    %c0_i32 = arith.constant 0 : i32
    %c0_i32_0 = arith.constant 0 : i32
    %c0_i32_1 = arith.constant 0 : i32
    return %c0_i32, %c0_i32_0 : i32, i32
  }
  func.func @transform_2(%arg0: i32) -> (i32, i32) {
    %c0_i32 = arith.constant 0 : i32
    %c0_i32_0 = arith.constant 0 : i32
    %c0_i32_1 = arith.constant 0 : i32
    return %c0_i32, %c0_i32_0 : i32, i32
  }
  func.func @transform_3(%arg0: i32) -> (i32, i32) {
    %c0_i32 = arith.constant 0 : i32
    %c0_i32_0 = arith.constant 0 : i32
    return %arg0, %c0_i32 : i32, i32
  }
}

</mosaic_0001>

<llo_original>
// kernel: patcher_unfold.1
$region0: #{patcher_unfold.1}
  #allocation0 [shape = 'u32[]', space=smem, size = 0x4, offset = 0x4, fixed_abs, tag = 'smem constant byte address 0x4 - core index']
  #allocation1 [shape = 'u32[144,128]{1,0:T(1,128)}', space=vmem, size = 0x12000, scoped, tag = 'internal scratch']
  %s0 = inlined_call_operand.vmem [shape: bf16[8,768], index: 0, kind: input, shape index: {}]
  %s1 = inlined_call_operand.hbm [shape: bf16[768,768], index: 1, kind: input, shape index: {}]
  %s2 = inlined_call_operand.hbm [shape: f32[1,768], index: 2, kind: input, shape index: {}]
  %s3 = inlined_call_operand.vmem [shape: f32[8,768], index: 3, kind: output, shape index: {}]
  %s4 = sld [smem:[#allocation0]]
  $region30: #{patcher_unfold.1} parent=0
    _
  %s6 = ssub.s32 1, %s4
  %s7 = scalar_select 0, %s6, %s4
  $region1: #{patcher_unfold.1} parent=0
    #allocation2 [shape = 'u8[1179648]{0}', space=vmem, size = 0x120000, scoped, tag = 'input window, operand 1, single buffered']
    #allocation3 [shape = 's32[1]{0}', space=sflag, size = 0x4, scoped, tag = 'scoped memory for patcher_unfold.1']
    #allocation4 [shape = 'u8[3072]{0}', space=vmem, size = 0xc00, scoped, tag = 'input window, operand 2, single buffered']
    #allocation5 [shape = 's32[1]{0}', space=sflag, size = 0x4, scoped, tag = 'scoped memory for patcher_unfold.1']
    %8 = vsyncpa [#allocation3], 0
    %9 = vsyncpa [#allocation5], 0
    // Predicated region
    $region2: #{patcher_unfold.1} parent=1 // pred_check
      _
    $region3: #{patcher_unfold.1} parent=1 // pred_check_branch
      %11 = sbr.rel (0) target = $region5
    $region4: #{patcher_unfold.1} parent=1 // pred_region
      _
    $region5: #{patcher_unfold.1} parent=1 // pred_fallthru
      _
    // Predicated region
    $region6: #{patcher_unfold.1} parent=1 // pred_check
      _
    $region7: #{patcher_unfold.1} parent=1 // pred_check_branch
      %13 = sbr.rel (0) target = $region9
    $region8: #{patcher_unfold.1} parent=1 // pred_region
      %s15 = ssub.s32 36864, 36864
      %16 = vsyncadd [#allocation3], %s15
      %s17 = sshll.u32 [#allocation2], 4
      %s18 = int_to_ptr.vmem [resolvable:$true] %s17
      %23 = dma.hbm_to_vmem [thread:$0]  %s1, 36864, %s18, [#allocation3], 384, 384, 24
    $region9: #{patcher_unfold.1} parent=1 // pred_fallthru
      _
    // Predicated region
    $region10: #{patcher_unfold.1} parent=1 // pred_check
      _
    $region11: #{patcher_unfold.1} parent=1 // pred_check_branch
      %25 = sbr.rel (0) target = $region13
    $region12: #{patcher_unfold.1} parent=1 // pred_region
      %s27 = ssub.s32 96, 96
      %28 = vsyncadd [#allocation5], %s27
      %s30 = sshll.u32 [#allocation4], 4
      %s31 = int_to_ptr.vmem [resolvable:$true] %s30
      %33 = dma.hbm_to_vmem [thread:$0]  %s2, 96, %s31, [#allocation5]
    $region13: #{patcher_unfold.1} parent=1 // pred_fallthru
      _
    // Predicated region
    $region14: #{patcher_unfold.1} parent=1 // pred_check
      _
    $region15: #{patcher_unfold.1} parent=1 // pred_check_branch
      %35 = sbr.rel (0) target = $region17
    $region16: #{patcher_unfold.1} parent=1 // pred_region
      %36 = dma.done [#allocation3], 36864
    $region17: #{patcher_unfold.1} parent=1 // pred_fallthru
      _
    // Predicated region
    $region18: #{patcher_unfold.1} parent=1 // pred_check
      _
    $region19: #{patcher_unfold.1} parent=1 // pred_check_branch
      %38 = sbr.rel (0) target = $region21
    $region20: #{patcher_unfold.1} parent=1 // pred_region
      %39 = dma.done [#allocation5], 96
    $region21: #{patcher_unfold.1} parent=1 // pred_fallthru
      _
    %v40 = vld [vmem:[%s0] sm:$0xff]
    %v41 = vld [vmem:[%s0 + $0x8] sm:$0xff]
    %v42 = vld [vmem:[%s0 + $0x10] sm:$0xff]
    %v43 = vld [vmem:[#allocation2] sm:$0xff]
    %v44 = vld [vmem:[#allocation2 + $0x8] sm:$0xff]
    %v45 = vld [vmem:[#allocation2 + $0x10] sm:$0xff]
    %v46 = vld [vmem:[#allocation2 + $0x18] sm:$0xff]
    %v47 = vld [vmem:[#allocation2 + $0x20] sm:$0xff]
    %v48 = vld [vmem:[#allocation2 + $0x28] sm:$0xff]
    %v49 = vld [vmem:[#allocation2 + $0x30] sm:$0xff]
    %v50 = vld [vmem:[#allocation2 + $0x38] sm:$0xff]
    %v51 = vld [vmem:[#allocation2 + $0x40] sm:$0xff]
    %v52 = vld [vmem:[#allocation2 + $0x48] sm:$0xff]
    %v53 = vld [vmem:[#allocation2 + $0x50] sm:$0xff]
    %v54 = vld [vmem:[#allocation2 + $0x58] sm:$0xff]
    %v55 = vld [vmem:[#allocation2 + $0x60] sm:$0xff]
    %v56 = vld [vmem:[#allocation2 + $0x68] sm:$0xff]
    %v57 = vld [vmem:[#allocation2 + $0x70] sm:$0xff]
    %v58 = vld [vmem:[#allocation2 + $0x78] sm:$0xff]
    %v59 = vld [vmem:[#allocation2 + $0x80] sm:$0xff]
    %v60 = vld [vmem:[#allocation2 + $0x88] sm:$0xff]
    %v61 = vld [vmem:[#allocation2 + $0x90] sm:$0xff]
    %v62 = vld [vmem:[#allocation2 + $0x98] sm:$0xff]
    %v63 = vld [vmem:[#allocation2 + $0xa0] sm:$0xff]
    %v64 = vld [vmem:[#allocation2 + $0xa8] sm:$0xff]
    %v65 = vld [vmem:[#allocation2 + $0xb0] sm:$0xff]
    %v66 = vld [vmem:[#allocation2 + $0xb8] sm:$0xff]
    %v67 = vld [vmem:[#allocation2 + $0xc0] sm:$0xff]
    %v68 = vld [vmem:[#allocation2 + $0xc8] sm:$0xff]
    %v69 = vld [vmem:[#allocation2 + $0xd0] sm:$0xff]
    %v70 = vld [vmem:[#allocation2 + $0xd8] sm:$0xff]
    %v71 = vld [vmem:[#allocation2 + $0xe0] sm:$0xff]
    %v72 = vld [vmem:[#allocation2 + $0xe8] sm:$0xff]
    %v73 = vld [vmem:[#allocation2 + $0xf0] sm:$0xff]
    %v74 = vld [vmem:[#allocation2 + $0xf8] sm:$0xff]
    %v75 = vld [vmem:[#allocation2 + $0x100] sm:$0xff]
    %v76 = vld [vmem:[#allocation2 + $0x108] sm:$0xff]
    %v77 = vld [vmem:[#allocation2 + $0x110] sm:$0xff]
    %v78 = vld [vmem:[#allocation2 + $0x118] sm:$0xff]
    %v79 = vld [vmem:[#allocation2 + $0x120] sm:$0xff]
    %v80 = vld [vmem:[#allocation2 + $0x128] sm:$0xff]
    %v81 = vld [vmem:[#allocation2 + $0x130] sm:$0xff]
    %v82 = vld [vmem:[#allocation2 + $0x138] sm:$0xff]
    %v83 = vld [vmem:[#allocation2 + $0x140] sm:$0xff]
    %v84 = vld [vmem:[#allocation2 + $0x148] sm:$0xff]
    %v85 = vld [vmem:[#allocation2 + $0x150] sm:$0xff]
    %v86 = vld [vmem:[#allocation2 + $0x158] sm:$0xff]
    %v87 = vld [vmem:[#allocation2 + $0x160] sm:$0xff]
    %v88 = vld [vmem:[#allocation2 + $0x168] sm:$0xff]
    %v89 = vld [vmem:[#allocation2 + $0x170] sm:$0xff]
    %v90 = vld [vmem:[#allocation2 + $0x178] sm:$0xff]
    %v91 = vld [vmem:[#allocation2 + $0x180] sm:$0xff]
    %v92 = vld [vmem:[#allocation2 + $0x188] sm:$0xff]
    %v93 = vld [vmem:[#allocation2 + $0x190] sm:$0xff]
    %v94 = vld [vmem:[#allocation2 + $0x198] sm:$0xff]
    %v95 = vld [vmem:[#allocation2 + $0x1a0] sm:$0xff]
    %v96 = vld [vmem:[#allocation2 + $0x1a8] sm:$0xff]
    %v97 = vld [vmem:[#allocation2 + $0x1b0] sm:$0xff]
    %v98 = vld [vmem:[#allocation2 + $0x1b8] sm:$0xff]
    %v99 = vld [vmem:[#allocation2 + $0x1c0] sm:$0xff]
    %v100 = vld [vmem:[#allocation2 + $0x1c8] sm:$0xff]
    %v101 = vld [vmem:[#allocation2 + $0x1d0] sm:$0xff]
    %v102 = vld [vmem:[#allocation2 + $0x1d8] sm:$0xff]
    %v103 = vld [vmem:[#allocation2 + $0x1e0] sm:$0xff]
    %v104 = vld [vmem:[#allocation2 + $0x1e8] sm:$0xff]
    %v105 = vld [vmem:[#allocation2 + $0x1f0] sm:$0xff]
    %v106 = vld [vmem:[#allocation2 + $0x1f8] sm:$0xff]
    %v107 = vld [vmem:[#allocation2 + $0x200] sm:$0xff]
    %v108 = vld [vmem:[#allocation2 + $0x208] sm:$0xff]
    %v109 = vld [vmem:[#allocation2 + $0x210] sm:$0xff]
    %v110 = vld [vmem:[#allocation2 + $0x218] sm:$0xff]
    %v111 = vld [vmem:[#allocation2 + $0x220] sm:$0xff]
    %v112 = vld [vmem:[#allocation2 + $0x228] sm:$0xff]
    %v113 = vld [vmem:[#allocation2 + $0x230] sm:$0xff]
    %v114 = vld [vmem:[#allocation2 + $0x238] sm:$0xff]
    %v115 = vld [vmem:[#allocation2 + $0x240] sm:$0xff]
    %v116 = vld [vmem:[#allocation2 + $0x248] sm:$0xff]
    %v117 = vld [vmem:[#allocation2 + $0x250] sm:$0xff]
    %v118 = vld [vmem:[#allocation2 + $0x258] sm:$0xff]
    %v119 = vld [vmem:[#allocation2 + $0x260] sm:$0xff]
    %v120 = vld [vmem:[#allocation2 + $0x268] sm:$0xff]
    %v121 = vld [vmem:[#allocation2 + $0x270] sm:$0xff]
    %v122 = vld [vmem:[#allocation2 + $0x278] sm:$0xff]
    %v123 = vld [vmem:[#allocation2 + $0x280] sm:$0xff]
    %v124 = vld [vmem:[#allocation2 + $0x288] sm:$0xff]
    %v125 = vld [vmem:[#allocation2 + $0x290] sm:$0xff]
    %v126 = vld [vmem:[#allocation2 + $0x298] sm:$0xff]
    %v127 = vld [vmem:[#allocation2 + $0x2a0] sm:$0xff]
    %v128 = vld [vmem:[#allocation2 + $0x2a8] sm:$0xff]
    %v129 = vld [vmem:[#allocation2 + $0x2b0] sm:$0xff]
    %v130 = vld [vmem:[#allocation2 + $0x2b8] sm:$0xff]
    %v131 = vld [vmem:[#allocation2 + $0x2c0] sm:$0xff]
    %v132 = vld [vmem:[#allocation2 + $0x2c8] sm:$0xff]
    %v133 = vld [vmem:[#allocation2 + $0x2d0] sm:$0xff]
    %v134 = vld [vmem:[#allocation2 + $0x2d8] sm:$0xff]
    %v135 = vld [vmem:[#allocation2 + $0x2e0] sm:$0xff]
    %v136 = vld [vmem:[#allocation2 + $0x2e8] sm:$0xff]
    %v137 = vld [vmem:[#allocation2 + $0x2f0] sm:$0xff]
    %v138 = vld [vmem:[#allocation2 + $0x2f8] sm:$0xff]
    %v139 = vld [vmem:[#allocation2 + $0x300] sm:$0xff]
    %v140 = vld [vmem:[#allocation2 + $0x308] sm:$0xff]
    %v141 = vld [vmem:[#allocation2 + $0x310] sm:$0xff]
    %v142 = vld [vmem:[#allocation2 + $0x318] sm:$0xff]
    %v143 = vld [vmem:[#allocation2 + $0x320] sm:$0xff]
    %v144 = vld [vmem:[#allocation2 + $0x328] sm:$0xff]
    %v145 = vld [vmem:[#allocation2 + $0x330] sm:$0xff]
    %v146 = vld [vmem:[#allocation2 + $0x338] sm:$0xff]
    %v147 = vld [vmem:[#allocation2 + $0x340] sm:$0xff]
    %v148 = vld [vmem:[#allocation2 + $0x348] sm:$0xff]
    %v149 = vld [vmem:[#allocation2 + $0x350] sm:$0xff]
    %v150 = vld [vmem:[#allocation2 + $0x358] sm:$0xff]
    %v151 = vld [vmem:[#allocation2 + $0x360] sm:$0xff]
    %v152 = vld [vmem:[#allocation2 + $0x368] sm:$0xff]
    %v153 = vld [vmem:[#allocation2 + $0x370] sm:$0xff]
    %v154 = vld [vmem:[#allocation2 + $0x378] sm:$0xff]
    %v155 = vld [vmem:[#allocation2 + $0x380] sm:$0xff]
    %v156 = vld [vmem:[#allocation2 + $0x388] sm:$0xff]
    %v157 = vld [vmem:[#allocation2 + $0x390] sm:$0xff]
    %v158 = vld [vmem:[#allocation2 + $0x398] sm:$0xff]
    %v159 = vld [vmem:[#allocation2 + $0x3a0] sm:$0xff]
    %v160 = vld [vmem:[#allocation2 + $0x3a8] sm:$0xff]
    %v161 = vld [vmem:[#allocation2 + $0x3b0] sm:$0xff]
    %v162 = vld [vmem:[#allocation2 + $0x3b8] sm:$0xff]
    %v163 = vld [vmem:[#allocation2 + $0x3c0] sm:$0xff]
    %v164 = vld [vmem:[#allocation2 + $0x3c8] sm:$0xff]
    %v165 = vld [vmem:[#allocation2 + $0x3d0] sm:$0xff]
    %v166 = vld [vmem:[#allocation2 + $0x3d8] sm:$0xff]
    %v167 = vld [vmem:[#allocation2 + $0x3e0] sm:$0xff]
    %v168 = vld [vmem:[#allocation2 + $0x3e8] sm:$0xff]
    %v169 = vld [vmem:[#allocation2 + $0x3f0] sm:$0xff]
    %v170 = vld [vmem:[#allocation2 + $0x3f8] sm:$0xff]
    %v171 = vld [vmem:[#allocation2 + $0x400] sm:$0xff]
    %v172 = vld [vmem:[#allocation2 + $0x408] sm:$0xff]
    %v173 = vld [vmem:[#allocation2 + $0x410] sm:$0xff]
    %v174 = vld [vmem:[#allocation2 + $0x418] sm:$0xff]
    %v175 = vld [vmem:[#allocation2 + $0x420] sm:$0xff]
    %v176 = vld [vmem:[#allocation2 + $0x428] sm:$0xff]
    %v177 = vld [vmem:[#allocation2 + $0x430] sm:$0xff]
    %v178 = vld [vmem:[#allocation2 + $0x438] sm:$0xff]
    %v179 = vld [vmem:[#allocation2 + $0x440] sm:$0xff]
    %v180 = vld [vmem:[#allocation2 + $0x448] sm:$0xff]
    %v181 = vld [vmem:[#allocation2 + $0x450] sm:$0xff]
    %v182 = vld [vmem:[#allocation2 + $0x458] sm:$0xff]
    %v183 = vld [vmem:[#allocation2 + $0x460] sm:$0xff]
    %v184 = vld [vmem:[#allocation2 + $0x468] sm:$0xff]
    %v185 = vld [vmem:[#allocation2 + $0x470] sm:$0xff]
    %v186 = vld [vmem:[#allocation2 + $0x478] sm:$0xff]
    %v187 = vld [vmem:[#allocation2 + $0x480] sm:$0xff]
    %v188 = vld [vmem:[#allocation2 + $0x488] sm:$0xff]
    %v189 = vld [vmem:[#allocation2 + $0x490] sm:$0xff]
    %v190 = vld [vmem:[#allocation2 + $0x498] sm:$0xff]
    %v191 = vld [vmem:[#allocation2 + $0x4a0] sm:$0xff]
    %v192 = vld [vmem:[#allocation2 + $0x4a8] sm:$0xff]
    %v193 = vld [vmem:[#allocation2 + $0x4b0] sm:$0xff]
    %v194 = vld [vmem:[#allocation2 + $0x4b8] sm:$0xff]
    %v195 = vld [vmem:[#allocation2 + $0x4c0] sm:$0xff]
    %v196 = vld [vmem:[#allocation2 + $0x4c8] sm:$0xff]
    %v197 = vld [vmem:[#allocation2 + $0x4d0] sm:$0xff]
    %v198 = vld [vmem:[#allocation2 + $0x4d8] sm:$0xff]
    %v199 = vld [vmem:[#allocation2 + $0x4e0] sm:$0xff]
    %v200 = vld [vmem:[#allocation2 + $0x4e8] sm:$0xff]
    %v201 = vld [vmem:[#allocation2 + $0x4f0] sm:$0xff]
    %v202 = vld [vmem:[#allocation2 + $0x4f8] sm:$0xff]
    %v203 = vld [vmem:[#allocation2 + $0x500] sm:$0xff]
    %v204 = vld [vmem:[#allocation2 + $0x508] sm:$0xff]
    %v205 = vld [vmem:[#allocation2 + $0x510] sm:$0xff]
    %v206 = vld [vmem:[#allocation2 + $0x518] sm:$0xff]
    %v207 = vld [vmem:[#allocation2 + $0x520] sm:$0xff]
    %v208 = vld [vmem:[#allocation2 + $0x528] sm:$0xff]
    %v209 = vld [vmem:[#allocation2 + $0x530] sm:$0xff]
    %v210 = vld [vmem:[#allocation2 + $0x538] sm:$0xff]
    %v211 = vld [vmem:[#allocation2 + $0x540] sm:$0xff]
    %v212 = vld [vmem:[#allocation2 + $0x548] sm:$0xff]
    %v213 = vld [vmem:[#allocation2 + $0x550] sm:$0xff]
    %v214 = vld [vmem:[#allocation2 + $0x558] sm:$0xff]
    %v215 = vld [vmem:[#allocation2 + $0x560] sm:$0xff]
    %v216 = vld [vmem:[#allocation2 + $0x568] sm:$0xff]
    %v217 = vld [vmem:[#allocation2 + $0x570] sm:$0xff]
    %v218 = vld [vmem:[#allocation2 + $0x578] sm:$0xff]
    %v219 = vld [vmem:[#allocation2 + $0x580] sm:$0xff]
    %v220 = vld [vmem:[#allocation2 + $0x588] sm:$0xff]
    %v221 = vld [vmem:[#allocation2 + $0x590] sm:$0xff]
    %v222 = vld [vmem:[#allocation2 + $0x598] sm:$0xff]
    %v223 = vld [vmem:[#allocation2 + $0x5a0] sm:$0xff]
    %v224 = vld [vmem:[#allocation2 + $0x5a8] sm:$0xff]
    %v225 = vld [vmem:[#allocation2 + $0x5b0] sm:$0xff]
    %v226 = vld [vmem:[#allocation2 + $0x5b8] sm:$0xff]
    %v227 = vld [vmem:[#allocation2 + $0x5c0] sm:$0xff]
    %v228 = vld [vmem:[#allocation2 + $0x5c8] sm:$0xff]
    %v229 = vld [vmem:[#allocation2 + $0x5d0] sm:$0xff]
    %v230 = vld [vmem:[#allocation2 + $0x5d8] sm:$0xff]
    %v231 = vld [vmem:[#allocation2 + $0x5e0] sm:$0xff]
    %v232 = vld [vmem:[#allocation2 + $0x5e8] sm:$0xff]
    %v233 = vld [vmem:[#allocation2 + $0x5f0] sm:$0xff]
    %v234 = vld [vmem:[#allocation2 + $0x5f8] sm:$0xff]
    %v235 = vld [vmem:[#allocation2 + $0x600] sm:$0xff]
    %v236 = vld [vmem:[#allocation2 + $0x608] sm:$0xff]
    %v237 = vld [vmem:[#allocation2 + $0x610] sm:$0xff]
    %v238 = vld [vmem:[#allocation2 + $0x618] sm:$0xff]
    %v239 = vld [vmem:[#allocation2 + $0x620] sm:$0xff]
    %v240 = vld [vmem:[#allocation2 + $0x628] sm:$0xff]
    %v241 = vld [vmem:[#allocation2 + $0x630] sm:$0xff]
    %v242 = vld [vmem:[#allocation2 + $0x638] sm:$0xff]
    %v243 = vld [vmem:[#allocation2 + $0x640] sm:$0xff]
    %v244 = vld [vmem:[#allocation2 + $0x648] sm:$0xff]
    %v245 = vld [vmem:[#allocation2 + $0x650] sm:$0xff]
    %v246 = vld [vmem:[#allocation2 + $0x658] sm:$0xff]
    %v247 = vld [vmem:[#allocation2 + $0x660] sm:$0xff]
    %v248 = vld [vmem:[#allocation2 + $0x668] sm:$0xff]
    %v249 = vld [vmem:[#allocation2 + $0x670] sm:$0xff]
    %v250 = vld [vmem:[#allocation2 + $0x678] sm:$0xff]
    %v251 = vld [vmem:[#allocation2 + $0x680] sm:$0xff]
    %v252 = vld [vmem:[#allocation2 + $0x688] sm:$0xff]
    %v253 = vld [vmem:[#allocation2 + $0x690] sm:$0xff]
    %v254 = vld [vmem:[#allocation2 + $0x698] sm:$0xff]
    %v255 = vld [vmem:[#allocation2 + $0x6a0] sm:$0xff]
    %v256 = vld [vmem:[#allocation2 + $0x6a8] sm:$0xff]
    %v257 = vld [vmem:[#allocation2 + $0x6b0] sm:$0xff]
    %v258 = vld [vmem:[#allocation2 + $0x6b8] sm:$0xff]
    %v259 = vld [vmem:[#allocation2 + $0x6c0] sm:$0xff]
    %v260 = vld [vmem:[#allocation2 + $0x6c8] sm:$0xff]
    %v261 = vld [vmem:[#allocation2 + $0x6d0] sm:$0xff]
    %v262 = vld [vmem:[#allocation2 + $0x6d8] sm:$0xff]
    %v263 = vld [vmem:[#allocation2 + $0x6e0] sm:$0xff]
    %v264 = vld [vmem:[#allocation2 + $0x6e8] sm:$0xff]
    %v265 = vld [vmem:[#allocation2 + $0x6f0] sm:$0xff]
    %v266 = vld [vmem:[#allocation2 + $0x6f8] sm:$0xff]
    %v267 = vld [vmem:[#allocation2 + $0x700] sm:$0xff]
    %v268 = vld [vmem:[#allocation2 + $0x708] sm:$0xff]
    %v269 = vld [vmem:[#allocation2 + $0x710] sm:$0xff]
    %v270 = vld [vmem:[#allocation2 + $0x718] sm:$0xff]
    %v271 = vld [vmem:[#allocation2 + $0x720] sm:$0xff]
    %v272 = vld [vmem:[#allocation2 + $0x728] sm:$0xff]
    %v273 = vld [vmem:[#allocation2 + $0x730] sm:$0xff]
    %v274 = vld [vmem:[#allocation2 + $0x738] sm:$0xff]
    %v275 = vld [vmem:[#allocation2 + $0x740] sm:$0xff]
    %v276 = vld [vmem:[#allocation2 + $0x748] sm:$0xff]
    %v277 = vld [vmem:[#allocation2 + $0x750] sm:$0xff]
    %v278 = vld [vmem:[#allocation2 + $0x758] sm:$0xff]
    %v279 = vld [vmem:[#allocation2 + $0x760] sm:$0xff]
    %v280 = vld [vmem:[#allocation2 + $0x768] sm:$0xff]
    %v281 = vld [vmem:[#allocation2 + $0x770] sm:$0xff]
    %v282 = vld [vmem:[#allocation2 + $0x778] sm:$0xff]
    %v283 = vld [vmem:[#allocation2 + $0x780] sm:$0xff]
    %v284 = vld [vmem:[#allocation2 + $0x788] sm:$0xff]
    %v285 = vld [vmem:[#allocation2 + $0x790] sm:$0xff]
    %v286 = vld [vmem:[#allocation2 + $0x798] sm:$0xff]
    %v287 = vld [vmem:[#allocation2 + $0x7a0] sm:$0xff]
    %v288 = vld [vmem:[#allocation2 + $0x7a8] sm:$0xff]
    %v289 = vld [vmem:[#allocation2 + $0x7b0] sm:$0xff]
    %v290 = vld [vmem:[#allocation2 + $0x7b8] sm:$0xff]
    %v291 = vld [vmem:[#allocation2 + $0x7c0] sm:$0xff]
    %v292 = vld [vmem:[#allocation2 + $0x7c8] sm:$0xff]
    %v293 = vld [vmem:[#allocation2 + $0x7d0] sm:$0xff]
    %v294 = vld [vmem:[#allocation2 + $0x7d8] sm:$0xff]
    %v295 = vld [vmem:[#allocation2 + $0x7e0] sm:$0xff]
    %v296 = vld [vmem:[#allocation2 + $0x7e8] sm:$0xff]
    %v297 = vld [vmem:[#allocation2 + $0x7f0] sm:$0xff]
    %v298 = vld [vmem:[#allocation2 + $0x7f8] sm:$0xff]
    %v299 = vld [vmem:[#allocation2 + $0x800] sm:$0xff]
    %v300 = vld [vmem:[#allocation2 + $0x808] sm:$0xff]
    %v301 = vld [vmem:[#allocation2 + $0x810] sm:$0xff]
    %v302 = vld [vmem:[#allocation2 + $0x818] sm:$0xff]
    %v303 = vld [vmem:[#allocation2 + $0x820] sm:$0xff]
    %v304 = vld [vmem:[#allocation2 + $0x828] sm:$0xff]
    %v305 = vld [vmem:[#allocation2 + $0x830] sm:$0xff]
    %v306 = vld [vmem:[#allocation2 + $0x838] sm:$0xff]
    %v307 = vld [vmem:[#allocation2 + $0x840] sm:$0xff]
    %v308 = vld [vmem:[#allocation2 + $0x848] sm:$0xff]
    %v309 = vld [vmem:[#allocation2 + $0x850] sm:$0xff]
    %v310 = vld [vmem:[#allocation2 + $0x858] sm:$0xff]
    %v311 = vld [vmem:[#allocation2 + $0x860] sm:$0xff]
    %v312 = vld [vmem:[#allocation2 + $0x868] sm:$0xff]
    %v313 = vld [vmem:[#allocation2 + $0x870] sm:$0xff]
    %v314 = vld [vmem:[#allocation2 + $0x878] sm:$0xff]
    %v315 = vld [vmem:[#allocation2 + $0x880] sm:$0xff]
    %v316 = vld [vmem:[#allocation2 + $0x888] sm:$0xff]
    %v317 = vld [vmem:[#allocation2 + $0x890] sm:$0xff]
    %v318 = vld [vmem:[#allocation2 + $0x898] sm:$0xff]
    %v319 = vld [vmem:[#allocation2 + $0x8a0] sm:$0xff]
    %v320 = vld [vmem:[#allocation2 + $0x8a8] sm:$0xff]
    %v321 = vld [vmem:[#allocation2 + $0x8b0] sm:$0xff]
    %v322 = vld [vmem:[#allocation2 + $0x8b8] sm:$0xff]
    %v323 = vld [vmem:[#allocation2 + $0x8c0] sm:$0xff]
    %v324 = vld [vmem:[#allocation2 + $0x8c8] sm:$0xff]
    %v325 = vld [vmem:[#allocation2 + $0x8d0] sm:$0xff]
    %v326 = vld [vmem:[#allocation2 + $0x8d8] sm:$0xff]
    %v327 = vld [vmem:[#allocation2 + $0x8e0] sm:$0xff]
    %v328 = vld [vmem:[#allocation2 + $0x8e8] sm:$0xff]
    %v329 = vld [vmem:[#allocation2 + $0x8f0] sm:$0xff]
    %v330 = vld [vmem:[#allocation2 + $0x8f8] sm:$0xff]
    %v331 = vld [vmem:[#allocation4] sm:$0x3f]
    %v333 = vlaneseq
    %v334 = vshrl.u32 %v333, 7
    %v335 = vsub.s32 0, %v334
    %v336 = vrot.slane %v331, %v335
    %v337 = vlaneseq
    %v338 = vshrl.u32 %v337, 7
    %v339 = vsub.s32 1, %v338
    %v340 = vrot.slane %v331, %v339
    %v341 = vlaneseq
    %v342 = vshrl.u32 %v341, 7
    %v343 = vsub.s32 2, %v342
    %v344 = vrot.slane %v331, %v343
    %v345 = vlaneseq
    %v346 = vshrl.u32 %v345, 7
    %v347 = vsub.s32 3, %v346
    %v348 = vrot.slane %v331, %v347
    %v349 = vlaneseq
    %v350 = vshrl.u32 %v349, 7
    %v351 = vsub.s32 4, %v350
    %v352 = vrot.slane %v331, %v351
    %v353 = vlaneseq
    %v354 = vshrl.u32 %v353, 7
    %v355 = vsub.s32 5, %v354
    %v356 = vrot.slane %v331, %v355
    %v366 = vunpack.c.l.b16 %v40
    %v367 = vunpack.c.h.b16 %v40
    %v368 = vunpack.c.l.b16 %v41
    %v369 = vunpack.c.h.b16 %v41
    %v370 = vunpack.c.l.b16 %v42
    %v371 = vunpack.c.h.b16 %v42
    %v372 = vpack.c.b16 %v366, %v366
    %v373 = vpack.c.b16 %v367, %v367
    %v374 = vpack.c.b16 %v368, %v368
    %v375 = vpack.c.b16 %v369, %v369
    %v376 = vpack.c.b16 %v370, %v370
    %v377 = vpack.c.b16 %v371, %v371
    %v672 = vunpack.c.l.b16 %v43
    %v673 = vunpack.c.h.b16 %v43
    %v674 = vunpack.c.l.b16 %v44
    %v675 = vunpack.c.h.b16 %v44
    %v676 = vunpack.c.l.b16 %v45
    %v677 = vunpack.c.h.b16 %v45
    %v678 = vunpack.c.l.b16 %v46
    %v679 = vunpack.c.h.b16 %v46
    %v680 = vunpack.c.l.b16 %v47
    %v681 = vunpack.c.h.b16 %v47
    %v682 = vunpack.c.l.b16 %v48
    %v683 = vunpack.c.h.b16 %v48
    %v684 = vunpack.c.l.b16 %v49
    %v685 = vunpack.c.h.b16 %v49
    %v686 = vunpack.c.l.b16 %v50
    %v687 = vunpack.c.h.b16 %v50
    %v688 = vunpack.c.l.b16 %v51
    %v689 = vunpack.c.h.b16 %v51
    %v690 = vunpack.c.l.b16 %v52
    %v691 = vunpack.c.h.b16 %v52
    %v692 = vunpack.c.l.b16 %v53
    %v693 = vunpack.c.h.b16 %v53
    %v694 = vunpack.c.l.b16 %v54
    %v695 = vunpack.c.h.b16 %v54
    %v696 = vunpack.c.l.b16 %v55
    %v697 = vunpack.c.h.b16 %v55
    %v698 = vunpack.c.l.b16 %v56
    %v699 = vunpack.c.h.b16 %v56
    %v700 = vunpack.c.l.b16 %v57
    %v701 = vunpack.c.h.b16 %v57
    %v702 = vunpack.c.l.b16 %v58
    %v703 = vunpack.c.h.b16 %v58
    %v704 = vunpack.c.l.b16 %v59
    %v705 = vunpack.c.h.b16 %v59
    %v706 = vunpack.c.l.b16 %v60
    %v707 = vunpack.c.h.b16 %v60
    %v708 = vunpack.c.l.b16 %v61
    %v709 = vunpack.c.h.b16 %v61
    %v710 = vunpack.c.l.b16 %v62
    %v711 = vunpack.c.h.b16 %v62
    %v712 = vunpack.c.l.b16 %v63
    %v713 = vunpack.c.h.b16 %v63
    %v714 = vunpack.c.l.b16 %v64
    %v715 = vunpack.c.h.b16 %v64
    %v716 = vunpack.c.l.b16 %v65
    %v717 = vunpack.c.h.b16 %v65
    %v718 = vunpack.c.l.b16 %v66
    %v719 = vunpack.c.h.b16 %v66
    %v720 = vunpack.c.l.b16 %v67
    %v721 = vunpack.c.h.b16 %v67
    %v722 = vunpack.c.l.b16 %v68
    %v723 = vunpack.c.h.b16 %v68
    %v724 = vunpack.c.l.b16 %v69
    %v725 = vunpack.c.h.b16 %v69
    %v726 = vunpack.c.l.b16 %v70
    %v727 = vunpack.c.h.b16 %v70
    %v728 = vunpack.c.l.b16 %v71
    %v729 = vunpack.c.h.b16 %v71
    %v730 = vunpack.c.l.b16 %v72
    %v731 = vunpack.c.h.b16 %v72
    %v732 = vunpack.c.l.b16 %v73
    %v733 = vunpack.c.h.b16 %v73
    %v734 = vunpack.c.l.b16 %v74
    %v735 = vunpack.c.h.b16 %v74
    %v736 = vunpack.c.l.b16 %v75
    %v737 = vunpack.c.h.b16 %v75
    %v738 = vunpack.c.l.b16 %v76
    %v739 = vunpack.c.h.b16 %v76
    %v740 = vunpack.c.l.b16 %v77
    %v741 = vunpack.c.h.b16 %v77
    %v742 = vunpack.c.l.b16 %v78
    %v743 = vunpack.c.h.b16 %v78
    %v744 = vunpack.c.l.b16 %v79
    %v745 = vunpack.c.h.b16 %v79
    %v746 = vunpack.c.l.b16 %v80
    %v747 = vunpack.c.h.b16 %v80
    %v748 = vunpack.c.l.b16 %v81
    %v749 = vunpack.c.h.b16 %v81
    %v750 = vunpack.c.l.b16 %v82
    %v751 = vunpack.c.h.b16 %v82
    %v752 = vunpack.c.l.b16 %v83
    %v753 = vunpack.c.h.b16 %v83
    %v754 = vunpack.c.l.b16 %v84
    %v755 = vunpack.c.h.b16 %v84
    %v756 = vunpack.c.l.b16 %v85
    %v757 = vunpack.c.h.b16 %v85
    %v758 = vunpack.c.l.b16 %v86
    %v759 = vunpack.c.h.b16 %v86
    %v760 = vunpack.c.l.b16 %v87
    %v761 = vunpack.c.h.b16 %v87
    %v762 = vunpack.c.l.b16 %v88
    %v763 = vunpack.c.h.b16 %v88
    %v764 = vunpack.c.l.b16 %v89
    %v765 = vunpack.c.h.b16 %v89
    %v766 = vunpack.c.l.b16 %v90
    %v767 = vunpack.c.h.b16 %v90
    %v768 = vunpack.c.l.b16 %v91
    %v769 = vunpack.c.h.b16 %v91
    %v770 = vunpack.c.l.b16 %v92
    %v771 = vunpack.c.h.b16 %v92
    %v772 = vunpack.c.l.b16 %v93
    %v773 = vunpack.c.h.b16 %v93
    %v774 = vunpack.c.l.b16 %v94
    %v775 = vunpack.c.h.b16 %v94
    %v776 = vunpack.c.l.b16 %v95
    %v777 = vunpack.c.h.b16 %v95
    %v778 = vunpack.c.l.b16 %v96
    %v779 = vunpack.c.h.b16 %v96
    %v780 = vunpack.c.l.b16 %v97
    %v781 = vunpack.c.h.b16 %v97
    %v782 = vunpack.c.l.b16 %v98
    %v783 = vunpack.c.h.b16 %v98
    %v784 = vunpack.c.l.b16 %v99
    %v785 = vunpack.c.h.b16 %v99
    %v786 = vunpack.c.l.b16 %v100
    %v787 = vunpack.c.h.b16 %v100
    %v788 = vunpack.c.l.b16 %v101
    %v789 = vunpack.c.h.b16 %v101
    %v790 = vunpack.c.l.b16 %v102
    %v791 = vunpack.c.h.b16 %v102
    %v792 = vunpack.c.l.b16 %v103
    %v793 = vunpack.c.h.b16 %v103
    %v794 = vunpack.c.l.b16 %v104
    %v795 = vunpack.c.h.b16 %v104
    %v796 = vunpack.c.l.b16 %v105
    %v797 = vunpack.c.h.b16 %v105
    %v798 = vunpack.c.l.b16 %v106
    %v799 = vunpack.c.h.b16 %v106
    %v800 = vunpack.c.l.b16 %v107
    %v801 = vunpack.c.h.b16 %v107
    %v802 = vunpack.c.l.b16 %v108
    %v803 = vunpack.c.h.b16 %v108
    %v804 = vunpack.c.l.b16 %v109
    %v805 = vunpack.c.h.b16 %v109
    %v806 = vunpack.c.l.b16 %v110
    %v807 = vunpack.c.h.b16 %v110
    %v808 = vunpack.c.l.b16 %v111
    %v809 = vunpack.c.h.b16 %v111
    %v810 = vunpack.c.l.b16 %v112
    %v811 = vunpack.c.h.b16 %v112
    %v812 = vunpack.c.l.b16 %v113
    %v813 = vunpack.c.h.b16 %v113
    %v814 = vunpack.c.l.b16 %v114
    %v815 = vunpack.c.h.b16 %v114
    %v816 = vunpack.c.l.b16 %v115
    %v817 = vunpack.c.h.b16 %v115
    %v818 = vunpack.c.l.b16 %v116
    %v819 = vunpack.c.h.b16 %v116
    %v820 = vunpack.c.l.b16 %v117
    %v821 = vunpack.c.h.b16 %v117
    %v822 = vunpack.c.l.b16 %v118
    %v823 = vunpack.c.h.b16 %v118
    %v824 = vunpack.c.l.b16 %v119
    %v825 = vunpack.c.h.b16 %v119
    %v826 = vunpack.c.l.b16 %v120
    %v827 = vunpack.c.h.b16 %v120
    %v828 = vunpack.c.l.b16 %v121
    %v829 = vunpack.c.h.b16 %v121
    %v830 = vunpack.c.l.b16 %v122
    %v831 = vunpack.c.h.b16 %v122
    %v832 = vunpack.c.l.b16 %v123
    %v833 = vunpack.c.h.b16 %v123
    %v834 = vunpack.c.l.b16 %v124
    %v835 = vunpack.c.h.b16 %v124
    %v836 = vunpack.c.l.b16 %v125
    %v837 = vunpack.c.h.b16 %v125
    %v838 = vunpack.c.l.b16 %v126
    %v839 = vunpack.c.h.b16 %v126
    %v840 = vunpack.c.l.b16 %v127
    %v841 = vunpack.c.h.b16 %v127
    %v842 = vunpack.c.l.b16 %v128
    %v843 = vunpack.c.h.b16 %v128
    %v844 = vunpack.c.l.b16 %v129
    %v845 = vunpack.c.h.b16 %v129
    %v846 = vunpack.c.l.b16 %v130
    %v847 = vunpack.c.h.b16 %v130
    %v848 = vunpack.c.l.b16 %v131
    %v849 = vunpack.c.h.b16 %v131
    %v850 = vunpack.c.l.b16 %v132
    %v851 = vunpack.c.h.b16 %v132
    %v852 = vunpack.c.l.b16 %v133
    %v853 = vunpack.c.h.b16 %v133
    %v854 = vunpack.c.l.b16 %v134
    %v855 = vunpack.c.h.b16 %v134
    %v856 = vunpack.c.l.b16 %v135
    %v857 = vunpack.c.h.b16 %v135
    %v858 = vunpack.c.l.b16 %v136
    %v859 = vunpack.c.h.b16 %v136
    %v860 = vunpack.c.l.b16 %v137
    %v861 = vunpack.c.h.b16 %v137
    %v862 = vunpack.c.l.b16 %v138
    %v863 = vunpack.c.h.b16 %v138
    %v864 = vunpack.c.l.b16 %v139
    %v865 = vunpack.c.h.b16 %v139
    %v866 = vunpack.c.l.b16 %v140
    %v867 = vunpack.c.h.b16 %v140
    %v868 = vunpack.c.l.b16 %v141
    %v869 = vunpack.c.h.b16 %v141
    %v870 = vunpack.c.l.b16 %v142
    %v871 = vunpack.c.h.b16 %v142
    %v872 = vunpack.c.l.b16 %v143
    %v873 = vunpack.c.h.b16 %v143
    %v874 = vunpack.c.l.b16 %v144
    %v875 = vunpack.c.h.b16 %v144
    %v876 = vunpack.c.l.b16 %v145
    %v877 = vunpack.c.h.b16 %v145
    %v878 = vunpack.c.l.b16 %v146
    %v879 = vunpack.c.h.b16 %v146
    %v880 = vunpack.c.l.b16 %v147
    %v881 = vunpack.c.h.b16 %v147
    %v882 = vunpack.c.l.b16 %v148
    %v883 = vunpack.c.h.b16 %v148
    %v884 = vunpack.c.l.b16 %v149
    %v885 = vunpack.c.h.b16 %v149
    %v886 = vunpack.c.l.b16 %v150
    %v887 = vunpack.c.h.b16 %v150
    %v888 = vunpack.c.l.b16 %v151
    %v889 = vunpack.c.h.b16 %v151
    %v890 = vunpack.c.l.b16 %v152
    %v891 = vunpack.c.h.b16 %v152
    %v892 = vunpack.c.l.b16 %v153
    %v893 = vunpack.c.h.b16 %v153
    %v894 = vunpack.c.l.b16 %v154
    %v895 = vunpack.c.h.b16 %v154
    %v896 = vunpack.c.l.b16 %v155
    %v897 = vunpack.c.h.b16 %v155
    %v898 = vunpack.c.l.b16 %v156
    %v899 = vunpack.c.h.b16 %v156
    %v900 = vunpack.c.l.b16 %v157
    %v901 = vunpack.c.h.b16 %v157
    %v902 = vunpack.c.l.b16 %v158
    %v903 = vunpack.c.h.b16 %v158
    %v904 = vunpack.c.l.b16 %v159
    %v905 = vunpack.c.h.b16 %v159
    %v906 = vunpack.c.l.b16 %v160
    %v907 = vunpack.c.h.b16 %v160
    %v908 = vunpack.c.l.b16 %v161
    %v909 = vunpack.c.h.b16 %v161
    %v910 = vunpack.c.l.b16 %v162
    %v911 = vunpack.c.h.b16 %v162
    %v912 = vunpack.c.l.b16 %v163
    %v913 = vunpack.c.h.b16 %v163
    %v914 = vunpack.c.l.b16 %v164
    %v915 = vunpack.c.h.b16 %v164
    %v916 = vunpack.c.l.b16 %v165
    %v917 = vunpack.c.h.b16 %v165
    %v918 = vunpack.c.l.b16 %v166
    %v919 = vunpack.c.h.b16 %v166
    %v920 = vunpack.c.l.b16 %v167
    %v921 = vunpack.c.h.b16 %v167
    %v922 = vunpack.c.l.b16 %v168
    %v923 = vunpack.c.h.b16 %v168
    %v924 = vunpack.c.l.b16 %v169
    %v925 = vunpack.c.h.b16 %v169
    %v926 = vunpack.c.l.b16 %v170
    %v927 = vunpack.c.h.b16 %v170
    %v928 = vunpack.c.l.b16 %v171
    %v929 = vunpack.c.h.b16 %v171
    %v930 = vunpack.c.l.b16 %v172
    %v931 = vunpack.c.h.b16 %v172
    %v932 = vunpack.c.l.b16 %v173
    %v933 = vunpack.c.h.b16 %v173
    %v934 = vunpack.c.l.b16 %v174
    %v935 = vunpack.c.h.b16 %v174
    %v936 = vunpack.c.l.b16 %v175
    %v937 = vunpack.c.h.b16 %v175
    %v938 = vunpack.c.l.b16 %v176
    %v939 = vunpack.c.h.b16 %v176
    %v940 = vunpack.c.l.b16 %v177
    %v941 = vunpack.c.h.b16 %v177
    %v942 = vunpack.c.l.b16 %v178
    %v943 = vunpack.c.h.b16 %v178
    %v944 = vunpack.c.l.b16 %v179
    %v945 = vunpack.c.h.b16 %v179
    %v946 = vunpack.c.l.b16 %v180
    %v947 = vunpack.c.h.b16 %v180
    %v948 = vunpack.c.l.b16 %v181
    %v949 = vunpack.c.h.b16 %v181
    %v950 = vunpack.c.l.b16 %v182
    %v951 = vunpack.c.h.b16 %v182
    %v952 = vunpack.c.l.b16 %v183
    %v953 = vunpack.c.h.b16 %v183
    %v954 = vunpack.c.l.b16 %v184
    %v955 = vunpack.c.h.b16 %v184
    %v956 = vunpack.c.l.b16 %v185
    %v957 = vunpack.c.h.b16 %v185
    %v958 = vunpack.c.l.b16 %v186
    %v959 = vunpack.c.h.b16 %v186
    %v960 = vunpack.c.l.b16 %v187
    %v961 = vunpack.c.h.b16 %v187
    %v962 = vunpack.c.l.b16 %v188
    %v963 = vunpack.c.h.b16 %v188
    %v964 = vunpack.c.l.b16 %v189
    %v965 = vunpack.c.h.b16 %v189
    %v966 = vunpack.c.l.b16 %v190
    %v967 = vunpack.c.h.b16 %v190
    %v968 = vunpack.c.l.b16 %v191
    %v969 = vunpack.c.h.b16 %v191
    %v970 = vunpack.c.l.b16 %v192
    %v971 = vunpack.c.h.b16 %v192
    %v972 = vunpack.c.l.b16 %v193
    %v973 = vunpack.c.h.b16 %v193
    %v974 = vunpack.c.l.b16 %v194
    %v975 = vunpack.c.h.b16 %v194
    %v976 = vunpack.c.l.b16 %v195
    %v977 = vunpack.c.h.b16 %v195
    %v978 = vunpack.c.l.b16 %v196
    %v979 = vunpack.c.h.b16 %v196
    %v980 = vunpack.c.l.b16 %v197
    %v981 = vunpack.c.h.b16 %v197
    %v982 = vunpack.c.l.b16 %v198
    %v983 = vunpack.c.h.b16 %v198
    %v984 = vunpack.c.l.b16 %v199
    %v985 = vunpack.c.h.b16 %v199
    %v986 = vunpack.c.l.b16 %v200
    %v987 = vunpack.c.h.b16 %v200
    %v988 = vunpack.c.l.b16 %v201
    %v989 = vunpack.c.h.b16 %v201
    %v990 = vunpack.c.l.b16 %v202
    %v991 = vunpack.c.h.b16 %v202
    %v992 = vunpack.c.l.b16 %v203
    %v993 = vunpack.c.h.b16 %v203
    %v994 = vunpack.c.l.b16 %v204
    %v995 = vunpack.c.h.b16 %v204
    %v996 = vunpack.c.l.b16 %v205
    %v997 = vunpack.c.h.b16 %v205
    %v998 = vunpack.c.l.b16 %v206
    %v999 = vunpack.c.h.b16 %v206
    %v1000 = vunpack.c.l.b16 %v207
    %v1001 = vunpack.c.h.b16 %v207
    %v1002 = vunpack.c.l.b16 %v208
    %v1003 = vunpack.c.h.b16 %v208
    %v1004 = vunpack.c.l.b16 %v209
    %v1005 = vunpack.c.h.b16 %v209
    %v1006 = vunpack.c.l.b16 %v210
    %v1007 = vunpack.c.h.b16 %v210
    %v1008 = vunpack.c.l.b16 %v211
    %v1009 = vunpack.c.h.b16 %v211
    %v1010 = vunpack.c.l.b16 %v212
    %v1011 = vunpack.c.h.b16 %v212
    %v1012 = vunpack.c.l.b16 %v213
    %v1013 = vunpack.c.h.b16 %v213
    %v1014 = vunpack.c.l.b16 %v214
    %v1015 = vunpack.c.h.b16 %v214
    %v1016 = vunpack.c.l.b16 %v215
    %v1017 = vunpack.c.h.b16 %v215
    %v1018 = vunpack.c.l.b16 %v216
    %v1019 = vunpack.c.h.b16 %v216
    %v1020 = vunpack.c.l.b16 %v217
    %v1021 = vunpack.c.h.b16 %v217
    %v1022 = vunpack.c.l.b16 %v218
    %v1023 = vunpack.c.h.b16 %v218
    %v1024 = vunpack.c.l.b16 %v219
    %v1025 = vunpack.c.h.b16 %v219
    %v1026 = vunpack.c.l.b16 %v220
    %v1027 = vunpack.c.h.b16 %v220
    %v1028 = vunpack.c.l.b16 %v221
    %v1029 = vunpack.c.h.b16 %v221
    %v1030 = vunpack.c.l.b16 %v222
    %v1031 = vunpack.c.h.b16 %v222
    %v1032 = vunpack.c.l.b16 %v223
    %v1033 = vunpack.c.h.b16 %v223
    %v1034 = vunpack.c.l.b16 %v224
    %v1035 = vunpack.c.h.b16 %v224
    %v1036 = vunpack.c.l.b16 %v225
    %v1037 = vunpack.c.h.b16 %v225
    %v1038 = vunpack.c.l.b16 %v226
    %v1039 = vunpack.c.h.b16 %v226
    %v1040 = vunpack.c.l.b16 %v227
    %v1041 = vunpack.c.h.b16 %v227
    %v1042 = vunpack.c.l.b16 %v228
    %v1043 = vunpack.c.h.b16 %v228
    %v1044 = vunpack.c.l.b16 %v229
    %v1045 = vunpack.c.h.b16 %v229
    %v1046 = vunpack.c.l.b16 %v230
    %v1047 = vunpack.c.h.b16 %v230
    %v1048 = vunpack.c.l.b16 %v231
    %v1049 = vunpack.c.h.b16 %v231
    %v1050 = vunpack.c.l.b16 %v232
    %v1051 = vunpack.c.h.b16 %v232
    %v1052 = vunpack.c.l.b16 %v233
    %v1053 = vunpack.c.h.b16 %v233
    %v1054 = vunpack.c.l.b16 %v234
    %v1055 = vunpack.c.h.b16 %v234
    %v1056 = vunpack.c.l.b16 %v235
    %v1057 = vunpack.c.h.b16 %v235
    %v1058 = vunpack.c.l.b16 %v236
    %v1059 = vunpack.c.h.b16 %v236
    %v1060 = vunpack.c.l.b16 %v237
    %v1061 = vunpack.c.h.b16 %v237
    %v1062 = vunpack.c.l.b16 %v238
    %v1063 = vunpack.c.h.b16 %v238
    %v1064 = vunpack.c.l.b16 %v239
    %v1065 = vunpack.c.h.b16 %v239
    %v1066 = vunpack.c.l.b16 %v240
    %v1067 = vunpack.c.h.b16 %v240
    %v1068 = vunpack.c.l.b16 %v241
    %v1069 = vunpack.c.h.b16 %v241
    %v1070 = vunpack.c.l.b16 %v242
    %v1071 = vunpack.c.h.b16 %v242
    %v1072 = vunpack.c.l.b16 %v243
    %v1073 = vunpack.c.h.b16 %v243
    %v1074 = vunpack.c.l.b16 %v244
    %v1075 = vunpack.c.h.b16 %v244
    %v1076 = vunpack.c.l.b16 %v245
    %v1077 = vunpack.c.h.b16 %v245
    %v1078 = vunpack.c.l.b16 %v246
    %v1079 = vunpack.c.h.b16 %v246
    %v1080 = vunpack.c.l.b16 %v247
    %v1081 = vunpack.c.h.b16 %v247
    %v1082 = vunpack.c.l.b16 %v248
    %v1083 = vunpack.c.h.b16 %v248
    %v1084 = vunpack.c.l.b16 %v249
    %v1085 = vunpack.c.h.b16 %v249
    %v1086 = vunpack.c.l.b16 %v250
    %v1087 = vunpack.c.h.b16 %v250
    %v1088 = vunpack.c.l.b16 %v251
    %v1089 = vunpack.c.h.b16 %v251
    %v1090 = vunpack.c.l.b16 %v252
    %v1091 = vunpack.c.h.b16 %v252
    %v1092 = vunpack.c.l.b16 %v253
    %v1093 = vunpack.c.h.b16 %v253
    %v1094 = vunpack.c.l.b16 %v254
    %v1095 = vunpack.c.h.b16 %v254
    %v1096 = vunpack.c.l.b16 %v255
    %v1097 = vunpack.c.h.b16 %v255
    %v1098 = vunpack.c.l.b16 %v256
    %v1099 = vunpack.c.h.b16 %v256
    %v1100 = vunpack.c.l.b16 %v257
    %v1101 = vunpack.c.h.b16 %v257
    %v1102 = vunpack.c.l.b16 %v258
    %v1103 = vunpack.c.h.b16 %v258
    %v1104 = vunpack.c.l.b16 %v259
    %v1105 = vunpack.c.h.b16 %v259
    %v1106 = vunpack.c.l.b16 %v260
    %v1107 = vunpack.c.h.b16 %v260
    %v1108 = vunpack.c.l.b16 %v261
    %v1109 = vunpack.c.h.b16 %v261
    %v1110 = vunpack.c.l.b16 %v262
    %v1111 = vunpack.c.h.b16 %v262
    %v1112 = vunpack.c.l.b16 %v263
    %v1113 = vunpack.c.h.b16 %v263
    %v1114 = vunpack.c.l.b16 %v264
    %v1115 = vunpack.c.h.b16 %v264
    %v1116 = vunpack.c.l.b16 %v265
    %v1117 = vunpack.c.h.b16 %v265
    %v1118 = vunpack.c.l.b16 %v266
    %v1119 = vunpack.c.h.b16 %v266
    %v1120 = vunpack.c.l.b16 %v267
    %v1121 = vunpack.c.h.b16 %v267
    %v1122 = vunpack.c.l.b16 %v268
    %v1123 = vunpack.c.h.b16 %v268
    %v1124 = vunpack.c.l.b16 %v269
    %v1125 = vunpack.c.h.b16 %v269
    %v1126 = vunpack.c.l.b16 %v270
    %v1127 = vunpack.c.h.b16 %v270
    %v1128 = vunpack.c.l.b16 %v271
    %v1129 = vunpack.c.h.b16 %v271
    %v1130 = vunpack.c.l.b16 %v272
    %v1131 = vunpack.c.h.b16 %v272
    %v1132 = vunpack.c.l.b16 %v273
    %v1133 = vunpack.c.h.b16 %v273
    %v1134 = vunpack.c.l.b16 %v274
    %v1135 = vunpack.c.h.b16 %v274
    %v1136 = vunpack.c.l.b16 %v275
    %v1137 = vunpack.c.h.b16 %v275
    %v1138 = vunpack.c.l.b16 %v276
    %v1139 = vunpack.c.h.b16 %v276
    %v1140 = vunpack.c.l.b16 %v277
    %v1141 = vunpack.c.h.b16 %v277
    %v1142 = vunpack.c.l.b16 %v278
    %v1143 = vunpack.c.h.b16 %v278
    %v1144 = vunpack.c.l.b16 %v279
    %v1145 = vunpack.c.h.b16 %v279
    %v1146 = vunpack.c.l.b16 %v280
    %v1147 = vunpack.c.h.b16 %v280
    %v1148 = vunpack.c.l.b16 %v281
    %v1149 = vunpack.c.h.b16 %v281
    %v1150 = vunpack.c.l.b16 %v282
    %v1151 = vunpack.c.h.b16 %v282
    %v1152 = vunpack.c.l.b16 %v283
    %v1153 = vunpack.c.h.b16 %v283
    %v1154 = vunpack.c.l.b16 %v284
    %v1155 = vunpack.c.h.b16 %v284
    %v1156 = vunpack.c.l.b16 %v285
    %v1157 = vunpack.c.h.b16 %v285
    %v1158 = vunpack.c.l.b16 %v286
    %v1159 = vunpack.c.h.b16 %v286
    %v1160 = vunpack.c.l.b16 %v287
    %v1161 = vunpack.c.h.b16 %v287
    %v1162 = vunpack.c.l.b16 %v288
    %v1163 = vunpack.c.h.b16 %v288
    %v1164 = vunpack.c.l.b16 %v289
    %v1165 = vunpack.c.h.b16 %v289
    %v1166 = vunpack.c.l.b16 %v290
    %v1167 = vunpack.c.h.b16 %v290
    %v1168 = vunpack.c.l.b16 %v291
    %v1169 = vunpack.c.h.b16 %v291
    %v1170 = vunpack.c.l.b16 %v292
    %v1171 = vunpack.c.h.b16 %v292
    %v1172 = vunpack.c.l.b16 %v293
    %v1173 = vunpack.c.h.b16 %v293
    %v1174 = vunpack.c.l.b16 %v294
    %v1175 = vunpack.c.h.b16 %v294
    %v1176 = vunpack.c.l.b16 %v295
    %v1177 = vunpack.c.h.b16 %v295
    %v1178 = vunpack.c.l.b16 %v296
    %v1179 = vunpack.c.h.b16 %v296
    %v1180 = vunpack.c.l.b16 %v297
    %v1181 = vunpack.c.h.b16 %v297
    %v1182 = vunpack.c.l.b16 %v298
    %v1183 = vunpack.c.h.b16 %v298
    %v1184 = vunpack.c.l.b16 %v299
    %v1185 = vunpack.c.h.b16 %v299
    %v1186 = vunpack.c.l.b16 %v300
    %v1187 = vunpack.c.h.b16 %v300
    %v1188 = vunpack.c.l.b16 %v301
    %v1189 = vunpack.c.h.b16 %v301
    %v1190 = vunpack.c.l.b16 %v302
    %v1191 = vunpack.c.h.b16 %v302
    %v1192 = vunpack.c.l.b16 %v303
    %v1193 = vunpack.c.h.b16 %v303
    %v1194 = vunpack.c.l.b16 %v304
    %v1195 = vunpack.c.h.b16 %v304
    %v1196 = vunpack.c.l.b16 %v305
    %v1197 = vunpack.c.h.b16 %v305
    %v1198 = vunpack.c.l.b16 %v306
    %v1199 = vunpack.c.h.b16 %v306
    %v1200 = vunpack.c.l.b16 %v307
    %v1201 = vunpack.c.h.b16 %v307
    %v1202 = vunpack.c.l.b16 %v308
    %v1203 = vunpack.c.h.b16 %v308
    %v1204 = vunpack.c.l.b16 %v309
    %v1205 = vunpack.c.h.b16 %v309
    %v1206 = vunpack.c.l.b16 %v310
    %v1207 = vunpack.c.h.b16 %v310
    %v1208 = vunpack.c.l.b16 %v311
    %v1209 = vunpack.c.h.b16 %v311
    %v1210 = vunpack.c.l.b16 %v312
    %v1211 = vunpack.c.h.b16 %v312
    %v1212 = vunpack.c.l.b16 %v313
    %v1213 = vunpack.c.h.b16 %v313
    %v1214 = vunpack.c.l.b16 %v314
    %v1215 = vunpack.c.h.b16 %v314
    %v1216 = vunpack.c.l.b16 %v315
    %v1217 = vunpack.c.h.b16 %v315
    %v1218 = vunpack.c.l.b16 %v316
    %v1219 = vunpack.c.h.b16 %v316
    %v1220 = vunpack.c.l.b16 %v317
    %v1221 = vunpack.c.h.b16 %v317
    %v1222 = vunpack.c.l.b16 %v318
    %v1223 = vunpack.c.h.b16 %v318
    %v1224 = vunpack.c.l.b16 %v319
    %v1225 = vunpack.c.h.b16 %v319
    %v1226 = vunpack.c.l.b16 %v320
    %v1227 = vunpack.c.h.b16 %v320
    %v1228 = vunpack.c.l.b16 %v321
    %v1229 = vunpack.c.h.b16 %v321
    %v1230 = vunpack.c.l.b16 %v322
    %v1231 = vunpack.c.h.b16 %v322
    %v1232 = vunpack.c.l.b16 %v323
    %v1233 = vunpack.c.h.b16 %v323
    %v1234 = vunpack.c.l.b16 %v324
    %v1235 = vunpack.c.h.b16 %v324
    %v1236 = vunpack.c.l.b16 %v325
    %v1237 = vunpack.c.h.b16 %v325
    %v1238 = vunpack.c.l.b16 %v326
    %v1239 = vunpack.c.h.b16 %v326
    %v1240 = vunpack.c.l.b16 %v327
    %v1241 = vunpack.c.h.b16 %v327
    %v1242 = vunpack.c.l.b16 %v328
    %v1243 = vunpack.c.h.b16 %v328
    %v1244 = vunpack.c.l.b16 %v329
    %v1245 = vunpack.c.h.b16 %v329
    %v1246 = vunpack.c.l.b16 %v330
    %v1247 = vunpack.c.h.b16 %v330
    %v1248 = vpack.c.b16 %v678, %v672
    %v1249 = vpack.c.b16 %v679, %v673
    %v1250 = vpack.c.b16 %v680, %v674
    %v1251 = vpack.c.b16 %v681, %v675
    %v1252 = vpack.c.b16 %v682, %v676
    %v1253 = vpack.c.b16 %v683, %v677
    %v1254 = vpack.c.b16 %v690, %v684
    %v1255 = vpack.c.b16 %v691, %v685
    %v1256 = vpack.c.b16 %v692, %v686
    %v1257 = vpack.c.b16 %v693, %v687
    %v1258 = vpack.c.b16 %v694, %v688
    %v1259 = vpack.c.b16 %v695, %v689
    %v1260 = vpack.c.b16 %v702, %v696
    %v1261 = vpack.c.b16 %v703, %v697
    %v1262 = vpack.c.b16 %v704, %v698
    %v1263 = vpack.c.b16 %v705, %v699
    %v1264 = vpack.c.b16 %v706, %v700
    %v1265 = vpack.c.b16 %v707, %v701
    %v1266 = vpack.c.b16 %v714, %v708
    %v1267 = vpack.c.b16 %v715, %v709
    %v1268 = vpack.c.b16 %v716, %v710
    %v1269 = vpack.c.b16 %v717, %v711
    %v1270 = vpack.c.b16 %v718, %v712
    %v1271 = vpack.c.b16 %v719, %v713
    %v1272 = vpack.c.b16 %v726, %v720
    %v1273 = vpack.c.b16 %v727, %v721
    %v1274 = vpack.c.b16 %v728, %v722
    %v1275 = vpack.c.b16 %v729, %v723
    %v1276 = vpack.c.b16 %v730, %v724
    %v1277 = vpack.c.b16 %v731, %v725
    %v1278 = vpack.c.b16 %v738, %v732
    %v1279 = vpack.c.b16 %v739, %v733
    %v1280 = vpack.c.b16 %v740, %v734
    %v1281 = vpack.c.b16 %v741, %v735
    %v1282 = vpack.c.b16 %v742, %v736
    %v1283 = vpack.c.b16 %v743, %v737
    %v1284 = vpack.c.b16 %v750, %v744
    %v1285 = vpack.c.b16 %v751, %v745
    %v1286 = vpack.c.b16 %v752, %v746
    %v1287 = vpack.c.b16 %v753, %v747
    %v1288 = vpack.c.b16 %v754, %v748
    %v1289 = vpack.c.b16 %v755, %v749
    %v1290 = vpack.c.b16 %v762, %v756
    %v1291 = vpack.c.b16 %v763, %v757
    %v1292 = vpack.c.b16 %v764, %v758
    %v1293 = vpack.c.b16 %v765, %v759
    %v1294 = vpack.c.b16 %v766, %v760
    %v1295 = vpack.c.b16 %v767, %v761
    %v1296 = vpack.c.b16 %v774, %v768
    %v1297 = vpack.c.b16 %v775, %v769
    %v1298 = vpack.c.b16 %v776, %v770
    %v1299 = vpack.c.b16 %v777, %v771
    %v1300 = vpack.c.b16 %v778, %v772
    %v1301 = vpack.c.b16 %v779, %v773
    %v1302 = vpack.c.b16 %v786, %v780
    %v1303 = vpack.c.b16 %v787, %v781
    %v1304 = vpack.c.b16 %v788, %v782
    %v1305 = vpack.c.b16 %v789, %v783
    %v1306 = vpack.c.b16 %v790, %v784
    %v1307 = vpack.c.b16 %v791, %v785
    %v1308 = vpack.c.b16 %v798, %v792
    %v1309 = vpack.c.b16 %v799, %v793
    %v1310 = vpack.c.b16 %v800, %v794
    %v1311 = vpack.c.b16 %v801, %v795
    %v1312 = vpack.c.b16 %v802, %v796
    %v1313 = vpack.c.b16 %v803, %v797
    %v1314 = vpack.c.b16 %v810, %v804
    %v1315 = vpack.c.b16 %v811, %v805
    %v1316 = vpack.c.b16 %v812, %v806
    %v1317 = vpack.c.b16 %v813, %v807
    %v1318 = vpack.c.b16 %v814, %v808
    %v1319 = vpack.c.b16 %v815, %v809
    %v1320 = vpack.c.b16 %v822, %v816
    %v1321 = vpack.c.b16 %v823, %v817
    %v1322 = vpack.c.b16 %v824, %v818
    %v1323 = vpack.c.b16 %v825, %v819
    %v1324 = vpack.c.b16 %v826, %v820
    %v1325 = vpack.c.b16 %v827, %v821
    %v1326 = vpack.c.b16 %v834, %v828
    %v1327 = vpack.c.b16 %v835, %v829
    %v1328 = vpack.c.b16 %v836, %v830
    %v1329 = vpack.c.b16 %v837, %v831
    %v1330 = vpack.c.b16 %v838, %v832
    %v1331 = vpack.c.b16 %v839, %v833
    %v1332 = vpack.c.b16 %v846, %v840
    %v1333 = vpack.c.b16 %v847, %v841
    %v1334 = vpack.c.b16 %v848, %v842
    %v1335 = vpack.c.b16 %v849, %v843
    %v1336 = vpack.c.b16 %v850, %v844
    %v1337 = vpack.c.b16 %v851, %v845
    %v1338 = vpack.c.b16 %v858, %v852
    %v1339 = vpack.c.b16 %v859, %v853
    %v1340 = vpack.c.b16 %v860, %v854
    %v1341 = vpack.c.b16 %v861, %v855
    %v1342 = vpack.c.b16 %v862, %v856
    %v1343 = vpack.c.b16 %v863, %v857
    %v1344 = vpack.c.b16 %v870, %v864
    %v1345 = vpack.c.b16 %v871, %v865
    %v1346 = vpack.c.b16 %v872, %v866
    %v1347 = vpack.c.b16 %v873, %v867
    %v1348 = vpack.c.b16 %v874, %v868
    %v1349 = vpack.c.b16 %v875, %v869
    %v1350 = vpack.c.b16 %v882, %v876
    %v1351 = vpack.c.b16 %v883, %v877
    %v1352 = vpack.c.b16 %v884, %v878
    %v1353 = vpack.c.b16 %v885, %v879
    %v1354 = vpack.c.b16 %v886, %v880
    %v1355 = vpack.c.b16 %v887, %v881
    %v1356 = vpack.c.b16 %v894, %v888
    %v1357 = vpack.c.b16 %v895, %v889
    %v1358 = vpack.c.b16 %v896, %v890
    %v1359 = vpack.c.b16 %v897, %v891
    %v1360 = vpack.c.b16 %v898, %v892
    %v1361 = vpack.c.b16 %v899, %v893
    %v1362 = vpack.c.b16 %v906, %v900
    %v1363 = vpack.c.b16 %v907, %v901
    %v1364 = vpack.c.b16 %v908, %v902
    %v1365 = vpack.c.b16 %v909, %v903
    %v1366 = vpack.c.b16 %v910, %v904
    %v1367 = vpack.c.b16 %v911, %v905
    %v1368 = vpack.c.b16 %v918, %v912
    %v1369 = vpack.c.b16 %v919, %v913
    %v1370 = vpack.c.b16 %v920, %v914
    %v1371 = vpack.c.b16 %v921, %v915
    %v1372 = vpack.c.b16 %v922, %v916
    %v1373 = vpack.c.b16 %v923, %v917
    %v1374 = vpack.c.b16 %v930, %v924
    %v1375 = vpack.c.b16 %v931, %v925
    %v1376 = vpack.c.b16 %v932, %v926
    %v1377 = vpack.c.b16 %v933, %v927
    %v1378 = vpack.c.b16 %v934, %v928
    %v1379 = vpack.c.b16 %v935, %v929
    %v1380 = vpack.c.b16 %v942, %v936
    %v1381 = vpack.c.b16 %v943, %v937
    %v1382 = vpack.c.b16 %v944, %v938
    %v1383 = vpack.c.b16 %v945, %v939
    %v1384 = vpack.c.b16 %v946, %v940
    %v1385 = vpack.c.b16 %v947, %v941
    %v1386 = vpack.c.b16 %v954, %v948
    %v1387 = vpack.c.b16 %v955, %v949
    %v1388 = vpack.c.b16 %v956, %v950
    %v1389 = vpack.c.b16 %v957, %v951
    %v1390 = vpack.c.b16 %v958, %v952
    %v1391 = vpack.c.b16 %v959, %v953
    %v1392 = vpack.c.b16 %v966, %v960
    %v1393 = vpack.c.b16 %v967, %v961
    %v1394 = vpack.c.b16 %v968, %v962
    %v1395 = vpack.c.b16 %v969, %v963
    %v1396 = vpack.c.b16 %v970, %v964
    %v1397 = vpack.c.b16 %v971, %v965
    %v1398 = vpack.c.b16 %v978, %v972
    %v1399 = vpack.c.b16 %v979, %v973
    %v1400 = vpack.c.b16 %v980, %v974
    %v1401 = vpack.c.b16 %v981, %v975
    %v1402 = vpack.c.b16 %v982, %v976
    %v1403 = vpack.c.b16 %v983, %v977
    %v1404 = vpack.c.b16 %v990, %v984
    %v1405 = vpack.c.b16 %v991, %v985
    %v1406 = vpack.c.b16 %v992, %v986
    %v1407 = vpack.c.b16 %v993, %v987
    %v1408 = vpack.c.b16 %v994, %v988
    %v1409 = vpack.c.b16 %v995, %v989
    %v1410 = vpack.c.b16 %v1002, %v996
    %v1411 = vpack.c.b16 %v1003, %v997
    %v1412 = vpack.c.b16 %v1004, %v998
    %v1413 = vpack.c.b16 %v1005, %v999
    %v1414 = vpack.c.b16 %v1006, %v1000
    %v1415 = vpack.c.b16 %v1007, %v1001
    %v1416 = vpack.c.b16 %v1014, %v1008
    %v1417 = vpack.c.b16 %v1015, %v1009
    %v1418 = vpack.c.b16 %v1016, %v1010
    %v1419 = vpack.c.b16 %v1017, %v1011
    %v1420 = vpack.c.b16 %v1018, %v1012
    %v1421 = vpack.c.b16 %v1019, %v1013
    %v1422 = vpack.c.b16 %v1026, %v1020
    %v1423 = vpack.c.b16 %v1027, %v1021
    %v1424 = vpack.c.b16 %v1028, %v1022
    %v1425 = vpack.c.b16 %v1029, %v1023
    %v1426 = vpack.c.b16 %v1030, %v1024
    %v1427 = vpack.c.b16 %v1031, %v1025
    %v1428 = vpack.c.b16 %v1038, %v1032
    %v1429 = vpack.c.b16 %v1039, %v1033
    %v1430 = vpack.c.b16 %v1040, %v1034
    %v1431 = vpack.c.b16 %v1041, %v1035
    %v1432 = vpack.c.b16 %v1042, %v1036
    %v1433 = vpack.c.b16 %v1043, %v1037
    %v1434 = vpack.c.b16 %v1050, %v1044
    %v1435 = vpack.c.b16 %v1051, %v1045
    %v1436 = vpack.c.b16 %v1052, %v1046
    %v1437 = vpack.c.b16 %v1053, %v1047
    %v1438 = vpack.c.b16 %v1054, %v1048
    %v1439 = vpack.c.b16 %v1055, %v1049
    %v1440 = vpack.c.b16 %v1062, %v1056
    %v1441 = vpack.c.b16 %v1063, %v1057
    %v1442 = vpack.c.b16 %v1064, %v1058
    %v1443 = vpack.c.b16 %v1065, %v1059
    %v1444 = vpack.c.b16 %v1066, %v1060
    %v1445 = vpack.c.b16 %v1067, %v1061
    %v1446 = vpack.c.b16 %v1074, %v1068
    %v1447 = vpack.c.b16 %v1075, %v1069
    %v1448 = vpack.c.b16 %v1076, %v1070
    %v1449 = vpack.c.b16 %v1077, %v1071
    %v1450 = vpack.c.b16 %v1078, %v1072
    %v1451 = vpack.c.b16 %v1079, %v1073
    %v1452 = vpack.c.b16 %v1086, %v1080
    %v1453 = vpack.c.b16 %v1087, %v1081
    %v1454 = vpack.c.b16 %v1088, %v1082
    %v1455 = vpack.c.b16 %v1089, %v1083
    %v1456 = vpack.c.b16 %v1090, %v1084
    %v1457 = vpack.c.b16 %v1091, %v1085
    %v1458 = vpack.c.b16 %v1098, %v1092
    %v1459 = vpack.c.b16 %v1099, %v1093
    %v1460 = vpack.c.b16 %v1100, %v1094
    %v1461 = vpack.c.b16 %v1101, %v1095
    %v1462 = vpack.c.b16 %v1102, %v1096
    %v1463 = vpack.c.b16 %v1103, %v1097
    %v1464 = vpack.c.b16 %v1110, %v1104
    %v1465 = vpack.c.b16 %v1111, %v1105
    %v1466 = vpack.c.b16 %v1112, %v1106
    %v1467 = vpack.c.b16 %v1113, %v1107
    %v1468 = vpack.c.b16 %v1114, %v1108
    %v1469 = vpack.c.b16 %v1115, %v1109
    %v1470 = vpack.c.b16 %v1122, %v1116
    %v1471 = vpack.c.b16 %v1123, %v1117
    %v1472 = vpack.c.b16 %v1124, %v1118
    %v1473 = vpack.c.b16 %v1125, %v1119
    %v1474 = vpack.c.b16 %v1126, %v1120
    %v1475 = vpack.c.b16 %v1127, %v1121
    %v1476 = vpack.c.b16 %v1134, %v1128
    %v1477 = vpack.c.b16 %v1135, %v1129
    %v1478 = vpack.c.b16 %v1136, %v1130
    %v1479 = vpack.c.b16 %v1137, %v1131
    %v1480 = vpack.c.b16 %v1138, %v1132
    %v1481 = vpack.c.b16 %v1139, %v1133
    %v1482 = vpack.c.b16 %v1146, %v1140
    %v1483 = vpack.c.b16 %v1147, %v1141
    %v1484 = vpack.c.b16 %v1148, %v1142
    %v1485 = vpack.c.b16 %v1149, %v1143
    %v1486 = vpack.c.b16 %v1150, %v1144
    %v1487 = vpack.c.b16 %v1151, %v1145
    %v1488 = vpack.c.b16 %v1158, %v1152
    %v1489 = vpack.c.b16 %v1159, %v1153
    %v1490 = vpack.c.b16 %v1160, %v1154
    %v1491 = vpack.c.b16 %v1161, %v1155
    %v1492 = vpack.c.b16 %v1162, %v1156
    %v1493 = vpack.c.b16 %v1163, %v1157
    %v1494 = vpack.c.b16 %v1170, %v1164
    %v1495 = vpack.c.b16 %v1171, %v1165
    %v1496 = vpack.c.b16 %v1172, %v1166
    %v1497 = vpack.c.b16 %v1173, %v1167
    %v1498 = vpack.c.b16 %v1174, %v1168
    %v1499 = vpack.c.b16 %v1175, %v1169
    %v1500 = vpack.c.b16 %v1182, %v1176
    %v1501 = vpack.c.b16 %v1183, %v1177
    %v1502 = vpack.c.b16 %v1184, %v1178
    %v1503 = vpack.c.b16 %v1185, %v1179
    %v1504 = vpack.c.b16 %v1186, %v1180
    %v1505 = vpack.c.b16 %v1187, %v1181
    %v1506 = vpack.c.b16 %v1194, %v1188
    %v1507 = vpack.c.b16 %v1195, %v1189
    %v1508 = vpack.c.b16 %v1196, %v1190
    %v1509 = vpack.c.b16 %v1197, %v1191
    %v1510 = vpack.c.b16 %v1198, %v1192
    %v1511 = vpack.c.b16 %v1199, %v1193
    %v1512 = vpack.c.b16 %v1206, %v1200
    %v1513 = vpack.c.b16 %v1207, %v1201
    %v1514 = vpack.c.b16 %v1208, %v1202
    %v1515 = vpack.c.b16 %v1209, %v1203
    %v1516 = vpack.c.b16 %v1210, %v1204
    %v1517 = vpack.c.b16 %v1211, %v1205
    %v1518 = vpack.c.b16 %v1218, %v1212
    %v1519 = vpack.c.b16 %v1219, %v1213
    %v1520 = vpack.c.b16 %v1220, %v1214
    %v1521 = vpack.c.b16 %v1221, %v1215
    %v1522 = vpack.c.b16 %v1222, %v1216
    %v1523 = vpack.c.b16 %v1223, %v1217
    %v1524 = vpack.c.b16 %v1230, %v1224
    %v1525 = vpack.c.b16 %v1231, %v1225
    %v1526 = vpack.c.b16 %v1232, %v1226
    %v1527 = vpack.c.b16 %v1233, %v1227
    %v1528 = vpack.c.b16 %v1234, %v1228
    %v1529 = vpack.c.b16 %v1235, %v1229
    %v1530 = vpack.c.b16 %v1242, %v1236
    %v1531 = vpack.c.b16 %v1243, %v1237
    %v1532 = vpack.c.b16 %v1244, %v1238
    %v1533 = vpack.c.b16 %v1245, %v1239
    %v1534 = vpack.c.b16 %v1246, %v1240
    %v1535 = vpack.c.b16 %v1247, %v1241
    %1824 = vmatprep.subr.bf16.mxu0 %v1249
    %1825 = vmatpush1.bf16.msra.mxu0 %v1248
    %1826 = vmatprep.subr.bf16.mxu0 %v1255
    %1827 = vmatpush1.bf16.msra.mxu0 %v1254
    %1828 = vmatprep.subr.bf16.mxu0 %v1261
    %1829 = vmatpush1.bf16.msra.mxu0 %v1260
    %1830 = vmatprep.subr.bf16.mxu0 %v1267
    %1831 = vmatpush1.bf16.msra.mxu0 %v1266
    %1832 = vmatprep.subr.bf16.mxu0 %v1273
    %1833 = vmatpush1.bf16.msra.mxu0 %v1272
    %1834 = vmatprep.subr.bf16.mxu0 %v1279
    %1835 = vmatpush1.bf16.msra.mxu0 %v1278
    %1836 = vmatprep.subr.bf16.mxu0 %v1285
    %1837 = vmatpush1.bf16.msra.mxu0 %v1284
    %1838 = vmatprep.subr.bf16.mxu0 %v1291
    %1839 = vmatpush1.bf16.msra.mxu0 %v1290
    %1840 = vmatprep.subr.bf16.mxu0 %v1297
    %1841 = vmatpush1.bf16.msra.mxu0 %v1296
    %1842 = vmatprep.subr.bf16.mxu0 %v1303
    %1843 = vmatpush1.bf16.msra.mxu0 %v1302
    %1844 = vmatprep.subr.bf16.mxu0 %v1309
    %1845 = vmatpush1.bf16.msra.mxu0 %v1308
    %1846 = vmatprep.subr.bf16.mxu0 %v1315
    %1847 = vmatpush1.bf16.msra.mxu0 %v1314
    %1848 = vmatprep.subr.bf16.mxu0 %v1321
    %1849 = vmatpush1.bf16.msra.mxu0 %v1320
    %1850 = vmatprep.subr.bf16.mxu0 %v1327
    %1851 = vmatpush1.bf16.msra.mxu0 %v1326
    %1852 = vmatprep.subr.bf16.mxu0 %v1333
    %1853 = vmatpush1.bf16.msra.mxu0 %v1332
    %1854 = vmatprep.subr.bf16.mxu0 %v1339
    %1855 = vmatpush1.bf16.msra.mxu0 %v1338
    %1856 = vmatprep.mubr.bf16.mxu0 %v373
    %1857 = vmatmul.mubr.bf16.gmra.mrb[0].mxu0 %v372
    %v1858 = vpop.f32.mrb[0].mxu0
    %v1859 = vadd.f32 %v336, %v1858
    %v1860 = vpop.f32.mrb[0].mxu0
    %v1861 = vadd.f32 %v340, %v1860
    %v1862 = vpop.f32.mrb[0].mxu0
    %v1863 = vpop.f32.mrb[0].mxu0
    %1864 = vdwg.mxu0
    %1865 = vmatprep.subr.bf16.mxu0 %v1345
    %1866 = vmatpush1.bf16.msra.mxu0 %v1344
    %1867 = vmatprep.subr.bf16.mxu0 %v1351
    %1868 = vmatpush1.bf16.msra.mxu0 %v1350
    %1869 = vmatprep.subr.bf16.mxu0 %v1357
    %1870 = vmatpush1.bf16.msra.mxu0 %v1356
    %1871 = vmatprep.subr.bf16.mxu0 %v1363
    %1872 = vmatpush1.bf16.msra.mxu0 %v1362
    %1873 = vmatprep.subr.bf16.mxu0 %v1369
    %1874 = vmatpush1.bf16.msra.mxu0 %v1368
    %1875 = vmatprep.subr.bf16.mxu0 %v1375
    %1876 = vmatpush1.bf16.msra.mxu0 %v1374
    %1877 = vmatprep.subr.bf16.mxu0 %v1381
    %1878 = vmatpush1.bf16.msra.mxu0 %v1380
    %1879 = vmatprep.subr.bf16.mxu0 %v1387
    %1880 = vmatpush1.bf16.msra.mxu0 %v1386
    %1881 = vmatprep.subr.bf16.mxu0 %v1393
    %1882 = vmatpush1.bf16.msra.mxu0 %v1392
    %1883 = vmatprep.subr.bf16.mxu0 %v1399
    %1884 = vmatpush1.bf16.msra.mxu0 %v1398
    %1885 = vmatprep.subr.bf16.mxu0 %v1405
    %1886 = vmatpush1.bf16.msra.mxu0 %v1404
    %1887 = vmatprep.subr.bf16.mxu0 %v1411
    %1888 = vmatpush1.bf16.msra.mxu0 %v1410
    %1889 = vmatprep.subr.bf16.mxu0 %v1417
    %1890 = vmatpush1.bf16.msra.mxu0 %v1416
    %1891 = vmatprep.subr.bf16.mxu0 %v1423
    %1892 = vmatpush1.bf16.msra.mxu0 %v1422
    %1893 = vmatprep.subr.bf16.mxu0 %v1429
    %1894 = vmatpush1.bf16.msra.mxu0 %v1428
    %1895 = vmatprep.subr.bf16.mxu0 %v1435
    %1896 = vmatpush1.bf16.msra.mxu0 %v1434
    %1897 = vmatprep.mubr.bf16.mxu0 %v375
    %1898 = vmatmul.mubr.bf16.gmra.mrb[0].mxu0 %v374
    %v1899 = vpop.f32.mrb[0].mxu0
    %v1900 = vadd.f32 %v1859, %v1899
    %v1901 = vpop.f32.mrb[0].mxu0
    %v1902 = vadd.f32 %v1861, %v1901
    %v1903 = vpop.f32.mrb[0].mxu0
    %v1904 = vpop.f32.mrb[0].mxu0
    %1905 = vdwg.mxu0
    %1906 = vmatprep.subr.bf16.mxu0 %v1441
    %1907 = vmatpush1.bf16.msra.mxu0 %v1440
    %1908 = vmatprep.subr.bf16.mxu0 %v1447
    %1909 = vmatpush1.bf16.msra.mxu0 %v1446
    %1910 = vmatprep.subr.bf16.mxu0 %v1453
    %1911 = vmatpush1.bf16.msra.mxu0 %v1452
    %1912 = vmatprep.subr.bf16.mxu0 %v1459
    %1913 = vmatpush1.bf16.msra.mxu0 %v1458
    %1914 = vmatprep.subr.bf16.mxu0 %v1465
    %1915 = vmatpush1.bf16.msra.mxu0 %v1464
    %1916 = vmatprep.subr.bf16.mxu0 %v1471
    %1917 = vmatpush1.bf16.msra.mxu0 %v1470
    %1918 = vmatprep.subr.bf16.mxu0 %v1477
    %1919 = vmatpush1.bf16.msra.mxu0 %v1476
    %1920 = vmatprep.subr.bf16.mxu0 %v1483
    %1921 = vmatpush1.bf16.msra.mxu0 %v1482
    %1922 = vmatprep.subr.bf16.mxu0 %v1489
    %1923 = vmatpush1.bf16.msra.mxu0 %v1488
    %1924 = vmatprep.subr.bf16.mxu0 %v1495
    %1925 = vmatpush1.bf16.msra.mxu0 %v1494
    %1926 = vmatprep.subr.bf16.mxu0 %v1501
    %1927 = vmatpush1.bf16.msra.mxu0 %v1500
    %1928 = vmatprep.subr.bf16.mxu0 %v1507
    %1929 = vmatpush1.bf16.msra.mxu0 %v1506
    %1930 = vmatprep.subr.bf16.mxu0 %v1513
    %1931 = vmatpush1.bf16.msra.mxu0 %v1512
    %1932 = vmatprep.subr.bf16.mxu0 %v1519
    %1933 = vmatpush1.bf16.msra.mxu0 %v1518
    %1934 = vmatprep.subr.bf16.mxu0 %v1525
    %1935 = vmatpush1.bf16.msra.mxu0 %v1524
    %1936 = vmatprep.subr.bf16.mxu0 %v1531
    %1937 = vmatpush1.bf16.msra.mxu0 %v1530
    %1938 = vmatprep.mubr.bf16.mxu0 %v377
    %1939 = vmatmul.mubr.bf16.gmra.mrb[0].mxu0 %v376
    %v1940 = vpop.f32.mrb[0].mxu0
    %v1941 = vadd.f32 %v1900, %v1940
    %v1942 = vpop.f32.mrb[0].mxu0
    %v1943 = vadd.f32 %v1902, %v1942
    %v1944 = vpop.f32.mrb[0].mxu0
    %v1945 = vpop.f32.mrb[0].mxu0
    %1946 = vdwg.mxu0
    %1947 = vmatprep.subr.bf16.mxu0 %v1251
    %1948 = vmatpush1.bf16.msra.mxu0 %v1250
    %1949 = vmatprep.subr.bf16.mxu0 %v1257
    %1950 = vmatpush1.bf16.msra.mxu0 %v1256
    %1951 = vmatprep.subr.bf16.mxu0 %v1263
    %1952 = vmatpush1.bf16.msra.mxu0 %v1262
    %1953 = vmatprep.subr.bf16.mxu0 %v1269
    %1954 = vmatpush1.bf16.msra.mxu0 %v1268
    %1955 = vmatprep.subr.bf16.mxu0 %v1275
    %1956 = vmatpush1.bf16.msra.mxu0 %v1274
    %1957 = vmatprep.subr.bf16.mxu0 %v1281
    %1958 = vmatpush1.bf16.msra.mxu0 %v1280
    %1959 = vmatprep.subr.bf16.mxu0 %v1287
    %1960 = vmatpush1.bf16.msra.mxu0 %v1286
    %1961 = vmatprep.subr.bf16.mxu0 %v1293
    %1962 = vmatpush1.bf16.msra.mxu0 %v1292
    %1963 = vmatprep.subr.bf16.mxu0 %v1299
    %1964 = vmatpush1.bf16.msra.mxu0 %v1298
    %1965 = vmatprep.subr.bf16.mxu0 %v1305
    %1966 = vmatpush1.bf16.msra.mxu0 %v1304
    %1967 = vmatprep.subr.bf16.mxu0 %v1311
    %1968 = vmatpush1.bf16.msra.mxu0 %v1310
    %1969 = vmatprep.subr.bf16.mxu0 %v1317
    %1970 = vmatpush1.bf16.msra.mxu0 %v1316
    %1971 = vmatprep.subr.bf16.mxu0 %v1323
    %1972 = vmatpush1.bf16.msra.mxu0 %v1322
    %1973 = vmatprep.subr.bf16.mxu0 %v1329
    %1974 = vmatpush1.bf16.msra.mxu0 %v1328
    %1975 = vmatprep.subr.bf16.mxu0 %v1335
    %1976 = vmatpush1.bf16.msra.mxu0 %v1334
    %1977 = vmatprep.subr.bf16.mxu0 %v1341
    %1978 = vmatpush1.bf16.msra.mxu0 %v1340
    %1979 = vmatprep.mubr.bf16.mxu0 %v373
    %1980 = vmatmul.mubr.bf16.gmra.mrb[0].mxu0 %v372
    %v1981 = vpop.f32.mrb[0].mxu0
    %v1982 = vadd.f32 %v344, %v1981
    %v1983 = vpop.f32.mrb[0].mxu0
    %v1984 = vadd.f32 %v348, %v1983
    %v1985 = vpop.f32.mrb[0].mxu0
    %v1986 = vpop.f32.mrb[0].mxu0
    %1987 = vdwg.mxu0
    %1988 = vmatprep.subr.bf16.mxu0 %v1347
    %1989 = vmatpush1.bf16.msra.mxu0 %v1346
    %1990 = vmatprep.subr.bf16.mxu0 %v1353
    %1991 = vmatpush1.bf16.msra.mxu0 %v1352
    %1992 = vmatprep.subr.bf16.mxu0 %v1359
    %1993 = vmatpush1.bf16.msra.mxu0 %v1358
    %1994 = vmatprep.subr.bf16.mxu0 %v1365
    %1995 = vmatpush1.bf16.msra.mxu0 %v1364
    %1996 = vmatprep.subr.bf16.mxu0 %v1371
    %1997 = vmatpush1.bf16.msra.mxu0 %v1370
    %1998 = vmatprep.subr.bf16.mxu0 %v1377
    %1999 = vmatpush1.bf16.msra.mxu0 %v1376
    %2000 = vmatprep.subr.bf16.mxu0 %v1383
    %2001 = vmatpush1.bf16.msra.mxu0 %v1382
    %2002 = vmatprep.subr.bf16.mxu0 %v1389
    %2003 = vmatpush1.bf16.msra.mxu0 %v1388
    %2004 = vmatprep.subr.bf16.mxu0 %v1395
    %2005 = vmatpush1.bf16.msra.mxu0 %v1394
    %2006 = vmatprep.subr.bf16.mxu0 %v1401
    %2007 = vmatpush1.bf16.msra.mxu0 %v1400
    %2008 = vmatprep.subr.bf16.mxu0 %v1407
    %2009 = vmatpush1.bf16.msra.mxu0 %v1406
    %2010 = vmatprep.subr.bf16.mxu0 %v1413
    %2011 = vmatpush1.bf16.msra.mxu0 %v1412
    %2012 = vmatprep.subr.bf16.mxu0 %v1419
    %2013 = vmatpush1.bf16.msra.mxu0 %v1418
    %2014 = vmatprep.subr.bf16.mxu0 %v1425
    %2015 = vmatpush1.bf16.msra.mxu0 %v1424
    %2016 = vmatprep.subr.bf16.mxu0 %v1431
    %2017 = vmatpush1.bf16.msra.mxu0 %v1430
    %2018 = vmatprep.subr.bf16.mxu0 %v1437
    %2019 = vmatpush1.bf16.msra.mxu0 %v1436
    %2020 = vmatprep.mubr.bf16.mxu0 %v375
    %2021 = vmatmul.mubr.bf16.gmra.mrb[0].mxu0 %v374
    %v2022 = vpop.f32.mrb[0].mxu0
    %v2023 = vadd.f32 %v1982, %v2022
    %v2024 = vpop.f32.mrb[0].mxu0
    %v2025 = vadd.f32 %v1984, %v2024
    %v2026 = vpop.f32.mrb[0].mxu0
    %v2027 = vpop.f32.mrb[0].mxu0
    %2028 = vdwg.mxu0
    %2029 = vmatprep.subr.bf16.mxu0 %v1443
    %2030 = vmatpush1.bf16.msra.mxu0 %v1442
    %2031 = vmatprep.subr.bf16.mxu0 %v1449
    %2032 = vmatpush1.bf16.msra.mxu0 %v1448
    %2033 = vmatprep.subr.bf16.mxu0 %v1455
    %2034 = vmatpush1.bf16.msra.mxu0 %v1454
    %2035 = vmatprep.subr.bf16.mxu0 %v1461
    %2036 = vmatpush1.bf16.msra.mxu0 %v1460
    %2037 = vmatprep.subr.bf16.mxu0 %v1467
    %2038 = vmatpush1.bf16.msra.mxu0 %v1466
    %2039 = vmatprep.subr.bf16.mxu0 %v1473
    %2040 = vmatpush1.bf16.msra.mxu0 %v1472
    %2041 = vmatprep.subr.bf16.mxu0 %v1479
    %2042 = vmatpush1.bf16.msra.mxu0 %v1478
    %2043 = vmatprep.subr.bf16.mxu0 %v1485
    %2044 = vmatpush1.bf16.msra.mxu0 %v1484
    %2045 = vmatprep.subr.bf16.mxu0 %v1491
    %2046 = vmatpush1.bf16.msra.mxu0 %v1490
    %2047 = vmatprep.subr.bf16.mxu0 %v1497
    %2048 = vmatpush1.bf16.msra.mxu0 %v1496
    %2049 = vmatprep.subr.bf16.mxu0 %v1503
    %2050 = vmatpush1.bf16.msra.mxu0 %v1502
    %2051 = vmatprep.subr.bf16.mxu0 %v1509
    %2052 = vmatpush1.bf16.msra.mxu0 %v1508
    %2053 = vmatprep.subr.bf16.mxu0 %v1515
    %2054 = vmatpush1.bf16.msra.mxu0 %v1514
    %2055 = vmatprep.subr.bf16.mxu0 %v1521
    %2056 = vmatpush1.bf16.msra.mxu0 %v1520
    %2057 = vmatprep.subr.bf16.mxu0 %v1527
    %2058 = vmatpush1.bf16.msra.mxu0 %v1526
    %2059 = vmatprep.subr.bf16.mxu0 %v1533
    %2060 = vmatpush1.bf16.msra.mxu0 %v1532
    %2061 = vmatprep.mubr.bf16.mxu0 %v377
    %2062 = vmatmul.mubr.bf16.gmra.mrb[0].mxu0 %v376
    %v2063 = vpop.f32.mrb[0].mxu0
    %v2064 = vadd.f32 %v2023, %v2063
    %v2065 = vpop.f32.mrb[0].mxu0
    %v2066 = vadd.f32 %v2025, %v2065
    %v2067 = vpop.f32.mrb[0].mxu0
    %v2068 = vpop.f32.mrb[0].mxu0
    %2069 = vdwg.mxu0
    %2070 = vmatprep.subr.bf16.mxu0 %v1253
    %2071 = vmatpush1.bf16.msra.mxu0 %v1252
    %2072 = vmatprep.subr.bf16.mxu0 %v1259
    %2073 = vmatpush1.bf16.msra.mxu0 %v1258
    %2074 = vmatprep.subr.bf16.mxu0 %v1265
    %2075 = vmatpush1.bf16.msra.mxu0 %v1264
    %2076 = vmatprep.subr.bf16.mxu0 %v1271
    %2077 = vmatpush1.bf16.msra.mxu0 %v1270
    %2078 = vmatprep.subr.bf16.mxu0 %v1277
    %2079 = vmatpush1.bf16.msra.mxu0 %v1276
    %2080 = vmatprep.subr.bf16.mxu0 %v1283
    %2081 = vmatpush1.bf16.msra.mxu0 %v1282
    %2082 = vmatprep.subr.bf16.mxu0 %v1289
    %2083 = vmatpush1.bf16.msra.mxu0 %v1288
    %2084 = vmatprep.subr.bf16.mxu0 %v1295
    %2085 = vmatpush1.bf16.msra.mxu0 %v1294
    %2086 = vmatprep.subr.bf16.mxu0 %v1301
    %2087 = vmatpush1.bf16.msra.mxu0 %v1300
    %2088 = vmatprep.subr.bf16.mxu0 %v1307
    %2089 = vmatpush1.bf16.msra.mxu0 %v1306
    %2090 = vmatprep.subr.bf16.mxu0 %v1313
    %2091 = vmatpush1.bf16.msra.mxu0 %v1312
    %2092 = vmatprep.subr.bf16.mxu0 %v1319
    %2093 = vmatpush1.bf16.msra.mxu0 %v1318
    %2094 = vmatprep.subr.bf16.mxu0 %v1325
    %2095 = vmatpush1.bf16.msra.mxu0 %v1324
    %2096 = vmatprep.subr.bf16.mxu0 %v1331
    %2097 = vmatpush1.bf16.msra.mxu0 %v1330
    %2098 = vmatprep.subr.bf16.mxu0 %v1337
    %2099 = vmatpush1.bf16.msra.mxu0 %v1336
    %2100 = vmatprep.subr.bf16.mxu0 %v1343
    %2101 = vmatpush1.bf16.msra.mxu0 %v1342
    %2102 = vmatprep.mubr.bf16.mxu0 %v373
    %2103 = vmatmul.mubr.bf16.gmra.mrb[0].mxu0 %v372
    %v2104 = vpop.f32.mrb[0].mxu0
    %v2105 = vadd.f32 %v352, %v2104
    %v2106 = vpop.f32.mrb[0].mxu0
    %v2107 = vadd.f32 %v356, %v2106
    %v2108 = vpop.f32.mrb[0].mxu0
    %v2109 = vpop.f32.mrb[0].mxu0
    %2110 = vdwg.mxu0
    %2111 = vmatprep.subr.bf16.mxu0 %v1349
    %2112 = vmatpush1.bf16.msra.mxu0 %v1348
    %2113 = vmatprep.subr.bf16.mxu0 %v1355
    %2114 = vmatpush1.bf16.msra.mxu0 %v1354
    %2115 = vmatprep.subr.bf16.mxu0 %v1361
    %2116 = vmatpush1.bf16.msra.mxu0 %v1360
    %2117 = vmatprep.subr.bf16.mxu0 %v1367
    %2118 = vmatpush1.bf16.msra.mxu0 %v1366
    %2119 = vmatprep.subr.bf16.mxu0 %v1373
    %2120 = vmatpush1.bf16.msra.mxu0 %v1372
    %2121 = vmatprep.subr.bf16.mxu0 %v1379
    %2122 = vmatpush1.bf16.msra.mxu0 %v1378
    %2123 = vmatprep.subr.bf16.mxu0 %v1385
    %2124 = vmatpush1.bf16.msra.mxu0 %v1384
    %2125 = vmatprep.subr.bf16.mxu0 %v1391
    %2126 = vmatpush1.bf16.msra.mxu0 %v1390
    %2127 = vmatprep.subr.bf16.mxu0 %v1397
    %2128 = vmatpush1.bf16.msra.mxu0 %v1396
    %2129 = vmatprep.subr.bf16.mxu0 %v1403
    %2130 = vmatpush1.bf16.msra.mxu0 %v1402
    %2131 = vmatprep.subr.bf16.mxu0 %v1409
    %2132 = vmatpush1.bf16.msra.mxu0 %v1408
    %2133 = vmatprep.subr.bf16.mxu0 %v1415
    %2134 = vmatpush1.bf16.msra.mxu0 %v1414
    %2135 = vmatprep.subr.bf16.mxu0 %v1421
    %2136 = vmatpush1.bf16.msra.mxu0 %v1420
    %2137 = vmatprep.subr.bf16.mxu0 %v1427
    %2138 = vmatpush1.bf16.msra.mxu0 %v1426
    %2139 = vmatprep.subr.bf16.mxu0 %v1433
    %2140 = vmatpush1.bf16.msra.mxu0 %v1432
    %2141 = vmatprep.subr.bf16.mxu0 %v1439
    %2142 = vmatpush1.bf16.msra.mxu0 %v1438
    %2143 = vmatprep.mubr.bf16.mxu0 %v375
    %2144 = vmatmul.mubr.bf16.gmra.mrb[0].mxu0 %v374
    %v2145 = vpop.f32.mrb[0].mxu0
    %v2146 = vadd.f32 %v2105, %v2145
    %v2147 = vpop.f32.mrb[0].mxu0
    %v2148 = vadd.f32 %v2107, %v2147
    %v2149 = vpop.f32.mrb[0].mxu0
    %v2150 = vpop.f32.mrb[0].mxu0
    %2151 = vdwg.mxu0
    %2152 = vmatprep.subr.bf16.mxu0 %v1445
    %2153 = vmatpush1.bf16.msra.mxu0 %v1444
    %2154 = vmatprep.subr.bf16.mxu0 %v1451
    %2155 = vmatpush1.bf16.msra.mxu0 %v1450
    %2156 = vmatprep.subr.bf16.mxu0 %v1457
    %2157 = vmatpush1.bf16.msra.mxu0 %v1456
    %2158 = vmatprep.subr.bf16.mxu0 %v1463
    %2159 = vmatpush1.bf16.msra.mxu0 %v1462
    %2160 = vmatprep.subr.bf16.mxu0 %v1469
    %2161 = vmatpush1.bf16.msra.mxu0 %v1468
    %2162 = vmatprep.subr.bf16.mxu0 %v1475
    %2163 = vmatpush1.bf16.msra.mxu0 %v1474
    %2164 = vmatprep.subr.bf16.mxu0 %v1481
    %2165 = vmatpush1.bf16.msra.mxu0 %v1480
    %2166 = vmatprep.subr.bf16.mxu0 %v1487
    %2167 = vmatpush1.bf16.msra.mxu0 %v1486
    %2168 = vmatprep.subr.bf16.mxu0 %v1493
    %2169 = vmatpush1.bf16.msra.mxu0 %v1492
    %2170 = vmatprep.subr.bf16.mxu0 %v1499
    %2171 = vmatpush1.bf16.msra.mxu0 %v1498
    %2172 = vmatprep.subr.bf16.mxu0 %v1505
    %2173 = vmatpush1.bf16.msra.mxu0 %v1504
    %2174 = vmatprep.subr.bf16.mxu0 %v1511
    %2175 = vmatpush1.bf16.msra.mxu0 %v1510
    %2176 = vmatprep.subr.bf16.mxu0 %v1517
    %2177 = vmatpush1.bf16.msra.mxu0 %v1516
    %2178 = vmatprep.subr.bf16.mxu0 %v1523
    %2179 = vmatpush1.bf16.msra.mxu0 %v1522
    %2180 = vmatprep.subr.bf16.mxu0 %v1529
    %2181 = vmatpush1.bf16.msra.mxu0 %v1528
    %2182 = vmatprep.subr.bf16.mxu0 %v1535
    %2183 = vmatpush1.bf16.msra.mxu0 %v1534
    %2184 = vmatprep.mubr.bf16.mxu0 %v377
    %2185 = vmatmul.mubr.bf16.gmra.mrb[0].mxu0 %v376
    %v2186 = vpop.f32.mrb[0].mxu0
    %v2187 = vadd.f32 %v2146, %v2186
    %v2188 = vpop.f32.mrb[0].mxu0
    %v2189 = vadd.f32 %v2148, %v2188
    %v2190 = vpop.f32.mrb[0].mxu0
    %v2191 = vpop.f32.mrb[0].mxu0
    %2192 = vdwg.mxu0
    %2193 = vst [vmem:[%s3] sm:$0xff] %v1941
    %2194 = vst [vmem:[%s3 + $0x8] sm:$0xff] %v1943
    %2195 = vst [vmem:[%s3 + $0x10] sm:$0xff] %v2064
    %2196 = vst [vmem:[%s3 + $0x18] sm:$0xff] %v2066
    %2197 = vst [vmem:[%s3 + $0x20] sm:$0xff] %v2187
    %2198 = vst [vmem:[%s3 + $0x28] sm:$0xff] %v2189
    // Predicated region
    $region22: #{patcher_unfold.1} parent=1 // pred_check
      _
    $region23: #{patcher_unfold.1} parent=1 // pred_check_branch
      %2200 = sbr.rel (0) target = $region25
    $region24: #{patcher_unfold.1} parent=1 // pred_region
      _
    $region25: #{patcher_unfold.1} parent=1 // pred_fallthru
      _
    // Predicated region
    $region26: #{patcher_unfold.1} parent=1 // pred_check
      _
    $region27: #{patcher_unfold.1} parent=1 // pred_check_branch
      %2202 = sbr.rel (0) target = $region29
    $region28: #{patcher_unfold.1} parent=1 // pred_region
      _
    $region29: #{patcher_unfold.1} parent=1 // pred_fallthru
      _
    %2203 = vsyncpa [#allocation3], 1
    %2204 = vsyncpa [#allocation5], 1

</llo_original>
